<compile_context>
chip_gen: v6e
topology: v6e:2x2x1
jax: 0.10.0
libtpu: 0.0.40
codegen_flags: <defaults>
</compile_context>

<pallas_src>
import jax
import jax.numpy as jnp
from jax import lax
from jax.experimental import pallas as pl
from jax.experimental.pallas import tpu as pltpu


def _lstm_fc_kernel(xg_ref,      # (Tc, Bblk, 4H) f32  pre-projected gates x@W_ih + b (time-major chunk)
                    w_hh_ref,    # (H, 4H)        f32  hidden->gates weights (transposed)
                    w_fc_ref,    # (H, Vpad)      f32  fc weights (transposed, lane-padded)
                    b_fc_ref,    # (1, Vpad)      f32  fc bias (lane-padded)
                    out_ref,     # (Bblk, Vpad)   f32  sigmoid(fc(h_T))
                    h_sc,        # (Bblk, H)      f32  persistent hidden state
                    c_sc):       # (Bblk, H)      f32  persistent cell state
    t_idx = pl.program_id(1)
    Tc = xg_ref.shape[0]
    H = h_sc.shape[1]

    @pl.when(t_idx == 0)
    def _():
        h_sc[...] = jnp.zeros_like(h_sc)
        c_sc[...] = jnp.zeros_like(c_sc)

    w_hh = w_hh_ref[...]            # hoisted out of the recurrence (loaded once)
    h = h_sc[...]
    c = c_sc[...]

    # Statically unrolled recurrence over this time chunk: one MXU dot per step.
    # TODO(synk): for production shapes on v6e/v7x, cast the MXU operands
    # (h, w_hh, w_fc) to bf16 while keeping preferred_element_type=f32.
    for s in range(Tc):
        gates = xg_ref[s] + jnp.dot(h, w_hh, preferred_element_type=jnp.float32)
        # PyTorch LSTM gate order: i, f, g, o.  H = 128 -> each slice is a
        # full 128-lane group (no sub-vreg relayout).
        i_g = jax.nn.sigmoid(gates[:, 0 * H:1 * H])
        f_g = jax.nn.sigmoid(gates[:, 1 * H:2 * H])
        g_g = jnp.tanh(gates[:, 2 * H:3 * H])
        o_g = jax.nn.sigmoid(gates[:, 3 * H:4 * H])
        c = f_g * c + i_g * g_g
        h = o_g * jnp.tanh(c)

    h_sc[...] = h
    c_sc[...] = c

    # out = sigmoid(fc(h_T))  -- dropout is identity at inference.
    @pl.when(t_idx == pl.num_programs(1) - 1)
    def _():
        logits = (jnp.dot(h, w_fc_ref[...], preferred_element_type=jnp.float32)
                  + b_fc_ref[...])
        out_ref[...] = jax.nn.sigmoid(logits)


def product_retirement_forward(x_ids, params, *, t_chunk=4, b_block=8):
    """x_ids: (B, T) int32 token ids.  Returns (B, vocab_size) f32 probabilities."""
    emb = params["embedding"]          # (V, E)
    w_ih_t = params["w_ih_t"]          # (E, 4H)
    w_hh_t = params["w_hh_t"]          # (H, 4H)
    b = params["b"]                    # (1, 4H) = b_ih + b_hh
    w_fc_t = params["w_fc_t"]          # (H, V)
    b_fc = params["b_fc"]              # (1, V)

    B, T = x_ids.shape
    V, E = emb.shape
    H = w_hh_t.shape[0]

    # ---- Hoisted input projection, fused with the embedding gather ---------
    # embedding(x) @ W_ih^T + b  ==  take(emb @ W_ih^T + b, x):
    # one big (V,E)@(E,4H) matmul instead of T tiny M=B matmuls inside the
    # serial loop, and no (B,T,E) activation ever hits HBM.
    proj_table = jnp.dot(emb, w_ih_t, preferred_element_type=jnp.float32) + b   # (V, 4H)
    x_gates = jnp.take(proj_table, x_ids, axis=0)                               # (B, T, 4H)

    # ---- Pad batch to fill f32 sublanes / MXU rows --------------------------
    b_pad = ((B + b_block - 1) // b_block) * b_block
    if b_pad != B:
        x_gates = jnp.pad(x_gates, ((0, b_pad - B), (0, 0), (0, 0)))
    x_gates = jnp.transpose(x_gates, (1, 0, 2))                                 # (T, Bpad, 4H)

    # ---- Lane-dense output: pad V to a multiple of 128 ----------------------
    v_pad = ((V + 127) // 128) * 128
    w_fc_p = jnp.pad(w_fc_t, ((0, 0), (0, v_pad - V)))
    b_fc_p = jnp.pad(b_fc, ((0, 0), (0, v_pad - V)))

    # ---- Time chunking (stream timesteps through the grid) ------------------
    tc = max(1, min(t_chunk, T))
    while T % tc:
        tc -= 1
    grid = (b_pad // b_block, T // tc)

    out = pl.pallas_call(
        _lstm_fc_kernel,
        out_shape=jax.ShapeDtypeStruct((b_pad, v_pad), jnp.float32),
        grid_spec=pltpu.PrefetchScalarGridSpec(
            num_scalar_prefetch=0,
            grid=grid,
            in_specs=[
                pl.BlockSpec((tc, b_block, 4 * H), lambda bi, ti: (ti, bi, 0)),
                pl.BlockSpec((H, 4 * H), lambda bi, ti: (0, 0)),
                pl.BlockSpec((H, v_pad), lambda bi, ti: (0, 0)),
                pl.BlockSpec((1, v_pad), lambda bi, ti: (0, 0)),
            ],
            out_specs=pl.BlockSpec((b_block, v_pad), lambda bi, ti: (bi, 0)),
            scratch_shapes=[
                pltpu.VMEM((b_block, H), jnp.float32),   # h
                pltpu.VMEM((b_block, H), jnp.float32),   # c
            ],
        ),
        compiler_params=pltpu.CompilerParams(
            dimension_semantics=("parallel", "arbitrary"),
            vmem_limit_bytes=32 * 1024 * 1024,
        ),
    )(x_gates, w_hh_t, w_fc_p, b_fc_p)

    return out[:B, :V]


def reference_forward(x_ids, params):
    """Pure-JAX reference for a correctness sanity check."""
    emb = params["embedding"]
    w_ih_t, w_hh_t, b = params["w_ih_t"], params["w_hh_t"], params["b"]
    w_fc_t, b_fc = params["w_fc_t"], params["b_fc"]
    H = w_hh_t.shape[0]

    embedded = jnp.take(emb, x_ids, axis=0)          # (B, T, E)
    B, T, _ = embedded.shape
    h = jnp.zeros((B, H), jnp.float32)
    c = jnp.zeros((B, H), jnp.float32)
    for t in range(T):
        gates = embedded[:, t, :] @ w_ih_t + h @ w_hh_t + b
        i_g = jax.nn.sigmoid(gates[:, 0 * H:1 * H])
        f_g = jax.nn.sigmoid(gates[:, 1 * H:2 * H])
        g_g = jnp.tanh(gates[:, 2 * H:3 * H])
        o_g = jax.nn.sigmoid(gates[:, 3 * H:4 * H])
        c = f_g * c + i_g * g_g
        h = o_g * jnp.tanh(c)
    return jax.nn.sigmoid(h @ w_fc_t + b_fc)


def init_params(key, vocab_size, embedding_dim, hidden_dim):
    ks = jax.random.split(key, 6)
    scale = 0.1
    return {
        "embedding": scale * jax.random.normal(
            ks[0], (vocab_size, embedding_dim), jnp.float32),
        # PyTorch stores W_ih as (4H, E); we pass it transposed: (E, 4H)
        "w_ih_t": scale * jax.random.normal(
            ks[1], (embedding_dim, 4 * hidden_dim), jnp.float32),
        # PyTorch stores W_hh as (4H, H); we pass it transposed: (H, 4H)
        "w_hh_t": scale * jax.random.normal(
            ks[2], (hidden_dim, 4 * hidden_dim), jnp.float32),
        # b = b_ih + b_hh, kept 2-D for clean broadcasting
        "b": scale * jax.random.normal(
            ks[3], (1, 4 * hidden_dim), jnp.float32),
        # PyTorch fc weight is (V, H); we pass it transposed: (H, V)
        "w_fc_t": scale * jax.random.normal(
            ks[4], (hidden_dim, vocab_size), jnp.float32),
        "b_fc": scale * jax.random.normal(
            ks[5], (1, vocab_size), jnp.float32),
    }


if __name__ == "__main__":
    # Shapes the module's forward implies: x is (batch, seq) int token ids,
    # embedding_dim=256, hidden_dim=128 (module defaults), small vocab.
    batch, seq = 2, 8
    vocab_size, embedding_dim, hidden_dim = 20, 256, 128

    key = jax.random.PRNGKey(0)
    k_param, k_ids = jax.random.split(key)
    params = init_params(k_param, vocab_size, embedding_dim, hidden_dim)
    x_ids = jax.random.randint(k_ids, (batch, seq), 0, vocab_size, dtype=jnp.int32)

    out = product_retirement_forward(x_ids, params)
    out = jax.block_until_ready(out)

    ref = reference_forward(x_ids, params)
    assert out.shape == (batch, vocab_size)
    assert jnp.allclose(out, ref, rtol=1e-4, atol=1e-4), "mismatch vs reference"

    # TODO(synk): dropout is implemented as identity (inference mode); training-mode
    # stochastic dropout would use pltpu.prng_seed / pltpu.stateful_bernoulli.
    print("KERNEL_OK")
</pallas_src>

<mosaic_0001>
module attributes {stable_mosaic.version = 11 : i64} {
  func.func @_lstm_fc_kernel(%arg0: i32, %arg1: i32, %arg2: memref<4x8x512xf32, #tpu.memory_space<vmem>>, %arg3: memref<128x512xf32, #tpu.memory_space<vmem>>, %arg4: memref<128x128xf32, #tpu.memory_space<vmem>>, %arg5: memref<1x128xf32, #tpu.memory_space<vmem>>, %arg6: memref<8x128xf32, #tpu.memory_space<vmem>>, %arg7: memref<8x128xf32, #tpu.memory_space<vmem>>, %arg8: memref<8x128xf32, #tpu.memory_space<vmem>>) attributes {dimension_semantics = [#tpu.dimension_semantics<parallel>, #tpu.dimension_semantics<arbitrary>], iteration_bounds = array<i64: 1, 2>, scalar_prefetch = 0 : i64, scratch_operands = 2 : i64, tpu.core_type = #tpu.core_type<tc>, window_params = [{transform_indices = @transform_0, window_bounds = array<i64: 4, 8, 512>}, {pipeline_mode = #tpu.pipeline_mode<synchronous>, transform_indices = @transform_1, window_bounds = array<i64: 128, 512>}, {pipeline_mode = #tpu.pipeline_mode<synchronous>, transform_indices = @transform_2, window_bounds = array<i64: 128, 128>}, {pipeline_mode = #tpu.pipeline_mode<synchronous>, transform_indices = @transform_3, window_bounds = array<i64: 1, 128>}, {transform_indices = @transform_4, window_bounds = array<i64: 8, 128>}]} {
    %c0_i32 = arith.constant 0 : i32
    %0 = arith.cmpi eq, %arg1, %c0_i32 : i32
    %1 = arith.extui %0 : i1 to i32
    %c0_i32_0 = arith.constant 0 : i32
    %2 = arith.cmpi ne, %1, %c0_i32_0 : i32
    scf.if %2 {
      %cst_35 = arith.constant 0.000000e+00 : f32
      %127 = vector.broadcast %cst_35 : f32 to vector<8x128xf32>
      %c0_36 = arith.constant 0 : index
      %c0_37 = arith.constant 0 : index
      %128 = vector.load %arg7[%c0_36, %c0_37] : memref<8x128xf32, #tpu.memory_space<vmem>>, vector<8x128xf32>
      tpu.vector_store %arg7[%c0_36, %c0_37], %127 {strides = array<i32>} : memref<8x128xf32, #tpu.memory_space<vmem>>, vector<8x128xf32>,
      %cst_38 = arith.constant 0.000000e+00 : f32
      %129 = vector.broadcast %cst_38 : f32 to vector<8x128xf32>
      %c0_39 = arith.constant 0 : index
      %c0_40 = arith.constant 0 : index
      %130 = vector.load %arg8[%c0_39, %c0_40] : memref<8x128xf32, #tpu.memory_space<vmem>>, vector<8x128xf32>
      tpu.vector_store %arg8[%c0_39, %c0_40], %129 {strides = array<i32>} : memref<8x128xf32, #tpu.memory_space<vmem>>, vector<8x128xf32>,
    } else {
    }
    %c0 = arith.constant 0 : index
    %c0_1 = arith.constant 0 : index
    %3 = vector.load %arg3[%c0, %c0_1] : memref<128x512xf32, #tpu.memory_space<vmem>>, vector<128x512xf32>
    %c0_2 = arith.constant 0 : index
    %c0_3 = arith.constant 0 : index
    %4 = vector.load %arg7[%c0_2, %c0_3] : memref<8x128xf32, #tpu.memory_space<vmem>>, vector<8x128xf32>
    %c0_4 = arith.constant 0 : index
    %c0_5 = arith.constant 0 : index
    %5 = vector.load %arg8[%c0_4, %c0_5] : memref<8x128xf32, #tpu.memory_space<vmem>>, vector<8x128xf32>
    %c0_6 = arith.constant 0 : index
    %c0_7 = arith.constant 0 : index
    %c0_8 = arith.constant 0 : index
    %6 = vector.load %arg2[%c0_6, %c0_7, %c0_8] : memref<4x8x512xf32, #tpu.memory_space<vmem>>, vector<1x8x512xf32>
    %7 = vector.shape_cast %6 : vector<1x8x512xf32> to vector<8x512xf32>
    %cst = arith.constant dense<0.000000e+00> : vector<8x512xf32>
    %8 = tpu.matmul %4, %3, %cst {dimension_numbers = #tpu.dot_dimension_numbers<[1], [0], [0], [1], [0, 0, 1, 1], [], []>} : vector<8x128xf32>, vector<128x512xf32>, vector<8x512xf32> -> vector<8x512xf32>
    %9 = arith.addf %7, %8 : vector<8x512xf32>
    %10 = vector.extract_strided_slice %9 {offsets = [0, 0], sizes = [8, 128], strides = [1, 1]} : vector<8x512xf32> to vector<8x128xf32>
    %11 = arith.negf %10 : vector<8x128xf32>
    %12 = math.exp %11 : vector<8x128xf32>
    %cst_9 = arith.constant 1.000000e+00 : f32
    %13 = vector.broadcast %cst_9 : f32 to vector<8x128xf32>
    %14 = arith.addf %13, %12 : vector<8x128xf32>
    %15 = arith.divf %13, %14 : vector<8x128xf32>
    %16 = vector.extract_strided_slice %9 {offsets = [0, 128], sizes = [8, 128], strides = [1, 1]} : vector<8x512xf32> to vector<8x128xf32>
    %17 = arith.negf %16 : vector<8x128xf32>
    %18 = math.exp %17 : vector<8x128xf32>
    %cst_10 = arith.constant 1.000000e+00 : f32
    %19 = vector.broadcast %cst_10 : f32 to vector<8x128xf32>
    %20 = arith.addf %19, %18 : vector<8x128xf32>
    %21 = arith.divf %19, %20 : vector<8x128xf32>
    %22 = vector.extract_strided_slice %9 {offsets = [0, 256], sizes = [8, 128], strides = [1, 1]} : vector<8x512xf32> to vector<8x128xf32>
    %23 = math.tanh %22 : vector<8x128xf32>
    %24 = vector.extract_strided_slice %9 {offsets = [0, 384], sizes = [8, 128], strides = [1, 1]} : vector<8x512xf32> to vector<8x128xf32>
    %25 = arith.negf %24 : vector<8x128xf32>
    %26 = math.exp %25 : vector<8x128xf32>
    %cst_11 = arith.constant 1.000000e+00 : f32
    %27 = vector.broadcast %cst_11 : f32 to vector<8x128xf32>
    %28 = arith.addf %27, %26 : vector<8x128xf32>
    %29 = arith.divf %27, %28 : vector<8x128xf32>
    %30 = arith.mulf %21, %5 : vector<8x128xf32>
    %31 = arith.mulf %15, %23 : vector<8x128xf32>
    %32 = arith.addf %30, %31 : vector<8x128xf32>
    %33 = math.tanh %32 : vector<8x128xf32>
    %34 = arith.mulf %29, %33 : vector<8x128xf32>
    %c1 = arith.constant 1 : index
    %c0_12 = arith.constant 0 : index
    %c0_13 = arith.constant 0 : index
    %35 = vector.load %arg2[%c1, %c0_12, %c0_13] : memref<4x8x512xf32, #tpu.memory_space<vmem>>, vector<1x8x512xf32>
    %36 = vector.shape_cast %35 : vector<1x8x512xf32> to vector<8x512xf32>
    %cst_14 = arith.constant dense<0.000000e+00> : vector<8x512xf32>
    %37 = tpu.matmul %34, %3, %cst_14 {dimension_numbers = #tpu.dot_dimension_numbers<[1], [0], [0], [1], [0, 0, 1, 1], [], []>} : vector<8x128xf32>, vector<128x512xf32>, vector<8x512xf32> -> vector<8x512xf32>
    %38 = arith.addf %36, %37 : vector<8x512xf32>
    %39 = vector.extract_strided_slice %38 {offsets = [0, 0], sizes = [8, 128], strides = [1, 1]} : vector<8x512xf32> to vector<8x128xf32>
    %40 = arith.negf %39 : vector<8x128xf32>
    %41 = math.exp %40 : vector<8x128xf32>
    %cst_15 = arith.constant 1.000000e+00 : f32
    %42 = vector.broadcast %cst_15 : f32 to vector<8x128xf32>
    %43 = arith.addf %42, %41 : vector<8x128xf32>
    %44 = arith.divf %42, %43 : vector<8x128xf32>
    %45 = vector.extract_strided_slice %38 {offsets = [0, 128], sizes = [8, 128], strides = [1, 1]} : vector<8x512xf32> to vector<8x128xf32>
    %46 = arith.negf %45 : vector<8x128xf32>
    %47 = math.exp %46 : vector<8x128xf32>
    %cst_16 = arith.constant 1.000000e+00 : f32
    %48 = vector.broadcast %cst_16 : f32 to vector<8x128xf32>
    %49 = arith.addf %48, %47 : vector<8x128xf32>
    %50 = arith.divf %48, %49 : vector<8x128xf32>
    %51 = vector.extract_strided_slice %38 {offsets = [0, 256], sizes = [8, 128], strides = [1, 1]} : vector<8x512xf32> to vector<8x128xf32>
    %52 = math.tanh %51 : vector<8x128xf32>
    %53 = vector.extract_strided_slice %38 {offsets = [0, 384], sizes = [8, 128], strides = [1, 1]} : vector<8x512xf32> to vector<8x128xf32>
    %54 = arith.negf %53 : vector<8x128xf32>
    %55 = math.exp %54 : vector<8x128xf32>
    %cst_17 = arith.constant 1.000000e+00 : f32
    %56 = vector.broadcast %cst_17 : f32 to vector<8x128xf32>
    %57 = arith.addf %56, %55 : vector<8x128xf32>
    %58 = arith.divf %56, %57 : vector<8x128xf32>
    %59 = arith.mulf %50, %32 : vector<8x128xf32>
    %60 = arith.mulf %44, %52 : vector<8x128xf32>
    %61 = arith.addf %59, %60 : vector<8x128xf32>
    %62 = math.tanh %61 : vector<8x128xf32>
    %63 = arith.mulf %58, %62 : vector<8x128xf32>
    %c2 = arith.constant 2 : index
    %c0_18 = arith.constant 0 : index
    %c0_19 = arith.constant 0 : index
    %64 = vector.load %arg2[%c2, %c0_18, %c0_19] : memref<4x8x512xf32, #tpu.memory_space<vmem>>, vector<1x8x512xf32>
    %65 = vector.shape_cast %64 : vector<1x8x512xf32> to vector<8x512xf32>
    %cst_20 = arith.constant dense<0.000000e+00> : vector<8x512xf32>
    %66 = tpu.matmul %63, %3, %cst_20 {dimension_numbers = #tpu.dot_dimension_numbers<[1], [0], [0], [1], [0, 0, 1, 1], [], []>} : vector<8x128xf32>, vector<128x512xf32>, vector<8x512xf32> -> vector<8x512xf32>
    %67 = arith.addf %65, %66 : vector<8x512xf32>
    %68 = vector.extract_strided_slice %67 {offsets = [0, 0], sizes = [8, 128], strides = [1, 1]} : vector<8x512xf32> to vector<8x128xf32>
    %69 = arith.negf %68 : vector<8x128xf32>
    %70 = math.exp %69 : vector<8x128xf32>
    %cst_21 = arith.constant 1.000000e+00 : f32
    %71 = vector.broadcast %cst_21 : f32 to vector<8x128xf32>
    %72 = arith.addf %71, %70 : vector<8x128xf32>
    %73 = arith.divf %71, %72 : vector<8x128xf32>
    %74 = vector.extract_strided_slice %67 {offsets = [0, 128], sizes = [8, 128], strides = [1, 1]} : vector<8x512xf32> to vector<8x128xf32>
    %75 = arith.negf %74 : vector<8x128xf32>
    %76 = math.exp %75 : vector<8x128xf32>
    %cst_22 = arith.constant 1.000000e+00 : f32
    %77 = vector.broadcast %cst_22 : f32 to vector<8x128xf32>
    %78 = arith.addf %77, %76 : vector<8x128xf32>
    %79 = arith.divf %77, %78 : vector<8x128xf32>
    %80 = vector.extract_strided_slice %67 {offsets = [0, 256], sizes = [8, 128], strides = [1, 1]} : vector<8x512xf32> to vector<8x128xf32>
    %81 = math.tanh %80 : vector<8x128xf32>
    %82 = vector.extract_strided_slice %67 {offsets = [0, 384], sizes = [8, 128], strides = [1, 1]} : vector<8x512xf32> to vector<8x128xf32>
    %83 = arith.negf %82 : vector<8x128xf32>
    %84 = math.exp %83 : vector<8x128xf32>
    %cst_23 = arith.constant 1.000000e+00 : f32
    %85 = vector.broadcast %cst_23 : f32 to vector<8x128xf32>
    %86 = arith.addf %85, %84 : vector<8x128xf32>
    %87 = arith.divf %85, %86 : vector<8x128xf32>
    %88 = arith.mulf %79, %61 : vector<8x128xf32>
    %89 = arith.mulf %73, %81 : vector<8x128xf32>
    %90 = arith.addf %88, %89 : vector<8x128xf32>
    %91 = math.tanh %90 : vector<8x128xf32>
    %92 = arith.mulf %87, %91 : vector<8x128xf32>
    %c3 = arith.constant 3 : index
    %c0_24 = arith.constant 0 : index
    %c0_25 = arith.constant 0 : index
    %93 = vector.load %arg2[%c3, %c0_24, %c0_25] : memref<4x8x512xf32, #tpu.memory_space<vmem>>, vector<1x8x512xf32>
    %94 = vector.shape_cast %93 : vector<1x8x512xf32> to vector<8x512xf32>
    %cst_26 = arith.constant dense<0.000000e+00> : vector<8x512xf32>
    %95 = tpu.matmul %92, %3, %cst_26 {dimension_numbers = #tpu.dot_dimension_numbers<[1], [0], [0], [1], [0, 0, 1, 1], [], []>} : vector<8x128xf32>, vector<128x512xf32>, vector<8x512xf32> -> vector<8x512xf32>
    %96 = arith.addf %94, %95 : vector<8x512xf32>
    %97 = vector.extract_strided_slice %96 {offsets = [0, 0], sizes = [8, 128], strides = [1, 1]} : vector<8x512xf32> to vector<8x128xf32>
    %98 = arith.negf %97 : vector<8x128xf32>
    %99 = math.exp %98 : vector<8x128xf32>
    %cst_27 = arith.constant 1.000000e+00 : f32
    %100 = vector.broadcast %cst_27 : f32 to vector<8x128xf32>
    %101 = arith.addf %100, %99 : vector<8x128xf32>
    %102 = arith.divf %100, %101 : vector<8x128xf32>
    %103 = vector.extract_strided_slice %96 {offsets = [0, 128], sizes = [8, 128], strides = [1, 1]} : vector<8x512xf32> to vector<8x128xf32>
    %104 = arith.negf %103 : vector<8x128xf32>
    %105 = math.exp %104 : vector<8x128xf32>
    %cst_28 = arith.constant 1.000000e+00 : f32
    %106 = vector.broadcast %cst_28 : f32 to vector<8x128xf32>
    %107 = arith.addf %106, %105 : vector<8x128xf32>
    %108 = arith.divf %106, %107 : vector<8x128xf32>
    %109 = vector.extract_strided_slice %96 {offsets = [0, 256], sizes = [8, 128], strides = [1, 1]} : vector<8x512xf32> to vector<8x128xf32>
    %110 = math.tanh %109 : vector<8x128xf32>
    %111 = vector.extract_strided_slice %96 {offsets = [0, 384], sizes = [8, 128], strides = [1, 1]} : vector<8x512xf32> to vector<8x128xf32>
    %112 = arith.negf %111 : vector<8x128xf32>
    %113 = math.exp %112 : vector<8x128xf32>
    %cst_29 = arith.constant 1.000000e+00 : f32
    %114 = vector.broadcast %cst_29 : f32 to vector<8x128xf32>
    %115 = arith.addf %114, %113 : vector<8x128xf32>
    %116 = arith.divf %114, %115 : vector<8x128xf32>
    %117 = arith.mulf %108, %90 : vector<8x128xf32>
    %118 = arith.mulf %102, %110 : vector<8x128xf32>
    %119 = arith.addf %117, %118 : vector<8x128xf32>
    %120 = math.tanh %119 : vector<8x128xf32>
    %121 = arith.mulf %116, %120 : vector<8x128xf32>
    %c0_30 = arith.constant 0 : index
    %c0_31 = arith.constant 0 : index
    %122 = vector.load %arg7[%c0_30, %c0_31] : memref<8x128xf32, #tpu.memory_space<vmem>>, vector<8x128xf32>
    tpu.vector_store %arg7[%c0_30, %c0_31], %121 {strides = array<i32>} : memref<8x128xf32, #tpu.memory_space<vmem>>, vector<8x128xf32>,
    %c0_32 = arith.constant 0 : index
    %c0_33 = arith.constant 0 : index
    %123 = vector.load %arg8[%c0_32, %c0_33] : memref<8x128xf32, #tpu.memory_space<vmem>>, vector<8x128xf32>
    tpu.vector_store %arg8[%c0_32, %c0_33], %119 {strides = array<i32>} : memref<8x128xf32, #tpu.memory_space<vmem>>, vector<8x128xf32>,
    %c1_i32 = arith.constant 1 : i32
    %124 = arith.cmpi eq, %arg1, %c1_i32 : i32
    %125 = arith.extui %124 : i1 to i32
    %c0_i32_34 = arith.constant 0 : i32
    %126 = arith.cmpi ne, %125, %c0_i32_34 : i32
    scf.if %126 {
      %c0_35 = arith.constant 0 : index
      %c0_36 = arith.constant 0 : index
      %127 = vector.load %arg4[%c0_35, %c0_36] : memref<128x128xf32, #tpu.memory_space<vmem>>, vector<128x128xf32>
      %cst_37 = arith.constant dense<0.000000e+00> : vector<8x128xf32>
      %128 = tpu.matmul %121, %127, %cst_37 {dimension_numbers = #tpu.dot_dimension_numbers<[1], [0], [0], [1], [0, 0, 1, 1], [], []>} : vector<8x128xf32>, vector<128x128xf32>, vector<8x128xf32> -> vector<8x128xf32>
      %c0_38 = arith.constant 0 : index
      %c0_39 = arith.constant 0 : index
      %129 = vector.load %arg5[%c0_38, %c0_39] : memref<1x128xf32, #tpu.memory_space<vmem>>, vector<1x128xf32>
      %130 = vector.broadcast %129 : vector<1x128xf32> to vector<8x128xf32>
      %131 = arith.addf %128, %130 : vector<8x128xf32>
      %132 = arith.negf %131 : vector<8x128xf32>
      %133 = math.exp %132 : vector<8x128xf32>
      %cst_40 = arith.constant 1.000000e+00 : f32
      %134 = vector.broadcast %cst_40 : f32 to vector<8x128xf32>
      %135 = arith.addf %134, %133 : vector<8x128xf32>
      %136 = arith.divf %134, %135 : vector<8x128xf32>
      %c0_41 = arith.constant 0 : index
      %c0_42 = arith.constant 0 : index
      %137 = vector.load %arg6[%c0_41, %c0_42] : memref<8x128xf32, #tpu.memory_space<vmem>>, vector<8x128xf32>
      tpu.vector_store %arg6[%c0_41, %c0_42], %136 {strides = array<i32>} : memref<8x128xf32, #tpu.memory_space<vmem>>, vector<8x128xf32>,
    } else {
    }
    return
  }
  func.func @transform_0(%arg0: i32, %arg1: i32) -> (i32, i32, i32) {
    %c0_i32 = arith.constant 0 : i32
    %c0_i32_0 = arith.constant 0 : i32
    return %arg1, %arg0, %c0_i32 : i32, i32, i32
  }
  func.func @transform_1(%arg0: i32, %arg1: i32) -> (i32, i32) {
    %c0_i32 = arith.constant 0 : i32
    %c0_i32_0 = arith.constant 0 : i32
    %c0_i32_1 = arith.constant 0 : i32
    return %c0_i32, %c0_i32_0 : i32, i32
  }
  func.func @transform_2(%arg0: i32, %arg1: i32) -> (i32, i32) {
    %c0_i32 = arith.constant 0 : i32
    %c0_i32_0 = arith.constant 0 : i32
    %c0_i32_1 = arith.constant 0 : i32
    return %c0_i32, %c0_i32_0 : i32, i32
  }
  func.func @transform_3(%arg0: i32, %arg1: i32) -> (i32, i32) {
    %c0_i32 = arith.constant 0 : i32
    %c0_i32_0 = arith.constant 0 : i32
    %c0_i32_1 = arith.constant 0 : i32
    return %c0_i32, %c0_i32_0 : i32, i32
  }
  func.func @transform_4(%arg0: i32, %arg1: i32) -> (i32, i32) {
    %c0_i32 = arith.constant 0 : i32
    %c0_i32_0 = arith.constant 0 : i32
    return %arg0, %c0_i32 : i32, i32
  }
}

</mosaic_0001>

<llo_original>
// kernel: tpu_custom_call.1
$region0: #{tpu_custom_call.1}
  #allocation0 [shape = 'u32[]', space=smem, size = 0x4, offset = 0x4, fixed_abs, tag = 'smem constant byte address 0x4 - core index']
  #allocation1 [shape = 'u32[144,128]{1,0:T(1,128)}', space=vmem, size = 0x12000, scoped, tag = 'internal scratch']
  #allocation2 [shape = 'f32[8,128]{1,0:T(8,128)}', space=vmem, size = 0x1000, scoped, tag = 'scratch operand']
  #allocation3 [shape = 'f32[8,128]{1,0:T(8,128)}', space=vmem, size = 0x1000, scoped, tag = 'scratch operand']
  %s0 = inlined_call_operand.hbm [shape: f32[8,8,512], index: 0, kind: input, shape index: {}]
  %s1 = inlined_call_operand.hbm [shape: f32[128,512], index: 1, kind: input, shape index: {}]
  %s2 = inlined_call_operand.hbm [shape: f32[128,128], index: 2, kind: input, shape index: {}]
  %s3 = inlined_call_operand.vmem [shape: f32[1,128], index: 3, kind: input, shape index: {}]
  %s4 = inlined_call_operand.hbm [shape: f32[8,128], index: 4, kind: output, shape index: {}]
  %s5 = sld [smem:[#allocation0]]
  $region69: #{tpu_custom_call.1} parent=0
    _
  %s7 = ssub.s32 1, %s5
  %s8 = scalar_select 0, %s7, %s5
  $region1: #{tpu_custom_call.1} parent=0
    #allocation4 [shape = 'u8[131072]{0}', space=vmem, size = 0x20000, scoped, tag = 'input window, operand 0']
    #allocation5 [shape = 's32[2]{0}', space=sflag, size = 0x8, scoped, tag = 'scoped memory for tpu_custom_call.1']
    #allocation6 [shape = 's32[2]{0}', space=sflag, size = 0x8, scoped, tag = 'scoped memory for tpu_custom_call.1']
    #allocation7 [shape = 'u8[262144]{0}', space=vmem, size = 0x40000, scoped, tag = 'input window, operand 1, single buffered']
    #allocation8 [shape = 's32[1]{0}', space=sflag, size = 0x4, scoped, tag = 'scoped memory for tpu_custom_call.1']
    #allocation9 [shape = 'u8[65536]{0}', space=vmem, size = 0x10000, scoped, tag = 'input window, operand 2, single buffered']
    #allocation10 [shape = 'u8[4096]{0}', space=vmem, size = 0x1000, scoped, tag = 'output window, operand 0, single buffered']
    %9 = vsyncpa [#allocation5], 0
    %s10 = scalar_lea.sflag [#allocation5], 1
    %11 = vsyncpa %s10, 0
    %12 = vsyncpa [#allocation8], 0
    %13 = vsyncpa [#allocation6], 0
    loop: start=0, step=1, limit=4
    $region2: #{tpu_custom_call.1} parent=1 // loop_pre_header
      _
    $region3: #{tpu_custom_call.1} parent=1 // loop_header
      %s15 = sphi 0, %s19
      %p16 = scmp.ge.s32.totalorder %s15, 4
      %s22 = sphi 0, %s34
      %s23 = sphi 0, %s30
      %s24 = sphi 0, %s22
      %s25 = sphi 0, %s23
      %s26 = sphi 0, %s24
      %s27 = sphi 0, %s25
      %s39 = sphi 0, %s41
      %s42 = sphi 0, %s39
      %s43 = sphi 0, %s42
      %s59 = sphi 0, %s43
      %s63 = sphi 0, %s63
      %s65 = sphi 0, %s63
      %s66 = sphi 0, %s65
      %s80 = sphi 0, %s66
      %s84 = sphi 0, %s84
      %s86 = sphi 0, %s84
      %s87 = sphi 0, %s86
      %s101 = sphi 0, %s87
      %s105 = sphi 0, %s105
      %s107 = sphi 0, %s105
      %s108 = sphi 0, %s107
      %s122 = sphi 0, %s108
      %s128 = sphi 0, %s130
      %s131 = sphi 0, %s128
      %s132 = sphi 0, %s131
      %s148 = sphi 0, %s132
    $region4: #{tpu_custom_call.1} parent=1 // loop_header_branch
      %18 = sbr.rel (%p16) target = $region8
    $region5: #{tpu_custom_call.1} parent=1 // loop_body
      %s20 = ssub.s32 %s15, 1
      %s21 = ssub.s32 %s15, 2
      %s28 = sadd.s32 1, %s23
      %p29 = scmp.ge.s32.totalorder %s28, 2
      %s30 = scalar_select %p29, 0, %s28
      %s31 = sadd.s32 1, %s22
      %s32 = scalar_select %p29, %s31, %s22
      %p33 = scmp.ge.s32.totalorder %s32, 1
      %s34 = scalar_select %p33, 0, %s32
      %s35 = ssub.s32 %s23, %s30
      %s36 = ssub.s32 %s22, %s34
      %s37 = sor.u32 %s35, %s36
      %p38 = scmp.eq.s32.totalorder %s37, 0
      %s40 = sadd.s32 %s39, 1
      %s41 = scalar_select %p38, %s39, %s40
      %p44 = pneg %p38
      %p45 = scmp.eq.s32.totalorder %s15, 1
      %p46 = por %p44, %p45
      %p47 = scmp.ne.s32.totalorder %s39, %s42
      %p48 = scmp.eq.s32.totalorder %s15, 0
      %p49 = por %p47, %p48
      %p50 = scmp.ne.s32.totalorder %s39, %s42
      %p51 = scmp.eq.s32.totalorder %s20, 1
      %p52 = por %p50, %p51
      %p53 = scmp.ne.s32.totalorder %s42, %s43
      %p54 = scmp.eq.s32.totalorder %s20, 0
      %p55 = por %p53, %p54
      %p56 = scmp.ne.s32.totalorder %s42, %s43
      %p57 = scmp.eq.s32.totalorder %s21, 1
      %p58 = por %p56, %p57
      %p60 = scmp.ne.s32.totalorder %s43, %s59
      %p61 = scmp.eq.s32.totalorder %s21, 0
      %p62 = por %p60, %p61
      %s64 = sadd.s32 %s63, 1
      %p67 = scmp.eq.s32.totalorder %s15, 1
      %p68 = scmp.ne.s32.totalorder %s63, %s65
      %p69 = scmp.eq.s32.totalorder %s15, 0
      %p70 = por %p68, %p69
      %p71 = scmp.ne.s32.totalorder %s63, %s65
      %p72 = scmp.eq.s32.totalorder %s20, 1
      %p73 = por %p71, %p72
      %p74 = scmp.ne.s32.totalorder %s65, %s66
      %p75 = scmp.eq.s32.totalorder %s20, 0
      %p76 = por %p74, %p75
      %p77 = scmp.ne.s32.totalorder %s65, %s66
      %p78 = scmp.eq.s32.totalorder %s21, 1
      %p79 = por %p77, %p78
      %p81 = scmp.ne.s32.totalorder %s66, %s80
      %p82 = scmp.eq.s32.totalorder %s21, 0
      %p83 = por %p81, %p82
      %s85 = sadd.s32 %s84, 1
      %p88 = scmp.eq.s32.totalorder %s15, 1
      %p89 = scmp.ne.s32.totalorder %s84, %s86
      %p90 = scmp.eq.s32.totalorder %s15, 0
      %p91 = por %p89, %p90
      %p92 = scmp.ne.s32.totalorder %s84, %s86
      %p93 = scmp.eq.s32.totalorder %s20, 1
      %p94 = por %p92, %p93
      %p95 = scmp.ne.s32.totalorder %s86, %s87
      %p96 = scmp.eq.s32.totalorder %s20, 0
      %p97 = por %p95, %p96
      %p98 = scmp.ne.s32.totalorder %s86, %s87
      %p99 = scmp.eq.s32.totalorder %s21, 1
      %p100 = por %p98, %p99
      %p102 = scmp.ne.s32.totalorder %s87, %s101
      %p103 = scmp.eq.s32.totalorder %s21, 0
      %p104 = por %p102, %p103
      %s106 = sadd.s32 %s105, 1
      %p109 = scmp.eq.s32.totalorder %s15, 1
      %p110 = scmp.ne.s32.totalorder %s105, %s107
      %p111 = scmp.eq.s32.totalorder %s15, 0
      %p112 = por %p110, %p111
      %p113 = scmp.ne.s32.totalorder %s105, %s107
      %p114 = scmp.eq.s32.totalorder %s20, 1
      %p115 = por %p113, %p114
      %p116 = scmp.ne.s32.totalorder %s107, %s108
      %p117 = scmp.eq.s32.totalorder %s20, 0
      %p118 = por %p116, %p117
      %p119 = scmp.ne.s32.totalorder %s107, %s108
      %p120 = scmp.eq.s32.totalorder %s21, 1
      %p121 = por %p119, %p120
      %p123 = scmp.ne.s32.totalorder %s108, %s122
      %p124 = scmp.eq.s32.totalorder %s21, 0
      %p125 = por %p123, %p124
      %s126 = ssub.s32 %s22, %s34
      %p127 = scmp.eq.s32.totalorder %s126, 0
      %s129 = sadd.s32 %s128, 1
      %s130 = scalar_select %p127, %s128, %s129
      %p133 = pneg %p127
      %p134 = scmp.eq.s32.totalorder %s15, 1
      %p135 = por %p133, %p134
      %p136 = scmp.ne.s32.totalorder %s128, %s131
      %p137 = scmp.eq.s32.totalorder %s15, 0
      %p138 = por %p136, %p137
      %p139 = scmp.ne.s32.totalorder %s128, %s131
      %p140 = scmp.eq.s32.totalorder %s20, 1
      %p141 = por %p139, %p140
      %p142 = scmp.ne.s32.totalorder %s131, %s132
      %p143 = scmp.eq.s32.totalorder %s20, 0
      %p144 = por %p142, %p143
      %p145 = scmp.ne.s32.totalorder %s131, %s132
      %p146 = scmp.eq.s32.totalorder %s21, 1
      %p147 = por %p145, %p146
      %p149 = scmp.ne.s32.totalorder %s132, %s148
      %p150 = scmp.eq.s32.totalorder %s21, 0
      %p151 = por %p149, %p150
      %p152 = scmp.le.s32.totalorder 1, %s15
      %p153 = scmp.lt.s32.totalorder %s15, 3
      %p154 = pnand %p152, %p153
      %p155 = pneg %p154
      // Predicated region
      $region9: #{tpu_custom_call.1} parent=5 // pred_check
        _
      $region10: #{tpu_custom_call.1} parent=5 // pred_check_branch
        %157 = sbr.rel (%p154) target = $region12
      $region11: #{tpu_custom_call.1} parent=5 // pred_region
        %s158 = ssub.s32 %s15, 1
        // Predicated region
        $region13: #{tpu_custom_call.1} parent=11 // pred_check
          %p159 = pneg %p76
        $region14: #{tpu_custom_call.1} parent=11 // pred_check_branch
          %161 = sbr.rel (%p159) target = $region16
        $region15: #{tpu_custom_call.1} parent=11 // pred_region
          %s163 = ssub.s32 8192, 8192
          %164 = vsyncadd [#allocation8], %s163
          %s165 = sshll.u32 [#allocation7], 4
          %s166 = int_to_ptr.vmem [resolvable:$true] %s165
          %171 = dma.hbm_to_vmem [thread:$0]  %s1, 8192, %s166, [#allocation8], 512, 512, 32
        $region16: #{tpu_custom_call.1} parent=11 // pred_fallthru
          _
        // Predicated region
        $region17: #{tpu_custom_call.1} parent=11 // pred_check
          %p172 = pneg %p97
        $region18: #{tpu_custom_call.1} parent=11 // pred_check_branch
          %174 = sbr.rel (%p172) target = $region20
        $region19: #{tpu_custom_call.1} parent=11 // pred_region
          %s176 = ssub.s32 2048, 2048
          %177 = vsyncadd [#allocation8], %s176
          %s178 = sshll.u32 [#allocation9], 4
          %s179 = int_to_ptr.vmem [resolvable:$true] %s178
          %184 = dma.hbm_to_vmem [thread:$0]  %s2, 2048, %s179, [#allocation8], 128, 128, 8
        $region20: #{tpu_custom_call.1} parent=11 // pred_fallthru
          _
        // Predicated region
        $region21: #{tpu_custom_call.1} parent=11 // pred_check
          %p185 = pneg %p118
        $region22: #{tpu_custom_call.1} parent=11 // pred_check_branch
          %187 = sbr.rel (%p185) target = $region24
        $region23: #{tpu_custom_call.1} parent=11 // pred_region
          _
        $region24: #{tpu_custom_call.1} parent=11 // pred_fallthru
          _
      $region12: #{tpu_custom_call.1} parent=5 // pred_fallthru
        _
      %p188 = scmp.lt.s32.totalorder %s15, 2
      // Predicated region
      $region25: #{tpu_custom_call.1} parent=5 // pred_check
        %p189 = pneg %p188
      $region26: #{tpu_custom_call.1} parent=5 // pred_check_branch
        %191 = sbr.rel (%p189) target = $region28
      $region27: #{tpu_custom_call.1} parent=5 // pred_region
        // Predicated region
        $region29: #{tpu_custom_call.1} parent=27 // pred_check
          %p192 = pneg %p49
        $region30: #{tpu_custom_call.1} parent=27 // pred_check_branch
          %194 = sbr.rel (%p192) target = $region32
        $region31: #{tpu_custom_call.1} parent=27 // pred_region
          %s195 = sand.u32 %s39, 1
          %s196 = scalar_lea.sflag [#allocation5], %s195
          %s197 = sand.u32 %s39, 1
          %s198 = smul.addr %s197, 128
          %s199 = scalar_lea.vmem [#allocation4], %s198
          %s200 = smul.u32 4, %s23
          %s202 = ssub.s32 2048, 2048
          %203 = vsyncadd %s196, %s202
          %s204 = smul.addr %s22, 4
          %s205 = smul.addr %s200, 4
          %s206 = sadd.s32 %s204, %s205
          %s207 = smul.addr %s206, 128
          %s208 = scalar_lea.hbm %s0, %s207
          %s209 = sshll.u32 %s199, 4
          %s210 = int_to_ptr.vmem [resolvable:$true] %s209
          %215 = dma.hbm_to_vmem [thread:$0]  %s208, 2048, %s210, %s196, 512, 512, 32
        $region32: #{tpu_custom_call.1} parent=27 // pred_fallthru
          _
      $region28: #{tpu_custom_call.1} parent=5 // pred_fallthru
        _
      %p216 = scmp.le.s32.totalorder 1, %s15
      %p217 = scmp.lt.s32.totalorder %s15, 3
      %p218 = pnand %p216, %p217
      %p219 = pneg %p218
      // Predicated region
      $region33: #{tpu_custom_call.1} parent=5 // pred_check
        _
      $region34: #{tpu_custom_call.1} parent=5 // pred_check_branch
        %221 = sbr.rel (%p218) target = $region36
      $region35: #{tpu_custom_call.1} parent=5 // pred_region
        %s222 = ssub.s32 %s15, 1
        %s223 = sand.u32 %s42, 1
        %s224 = scalar_lea.sflag [#allocation5], %s223
        %s225 = sand.u32 %s42, 1
        %s226 = smul.addr %s225, 128
        %s227 = scalar_lea.vmem [#allocation4], %s226
        // Predicated region
        $region37: #{tpu_custom_call.1} parent=35 // pred_check
          %p228 = pneg %p55
        $region38: #{tpu_custom_call.1} parent=35 // pred_check_branch
          %230 = sbr.rel (%p228) target = $region40
        $region39: #{tpu_custom_call.1} parent=35 // pred_region
          %231 = dma.done %s224, 2048
        $region40: #{tpu_custom_call.1} parent=35 // pred_fallthru
          _
        // Predicated region
        $region41: #{tpu_custom_call.1} parent=35 // pred_check
          %p232 = pneg %p76
        $region42: #{tpu_custom_call.1} parent=35 // pred_check_branch
          %234 = sbr.rel (%p232) target = $region44
        $region43: #{tpu_custom_call.1} parent=35 // pred_region
          %235 = dma.done [#allocation8], 8192
        $region44: #{tpu_custom_call.1} parent=35 // pred_fallthru
          _
        // Predicated region
        $region45: #{tpu_custom_call.1} parent=35 // pred_check
          %p236 = pneg %p97
        $region46: #{tpu_custom_call.1} parent=35 // pred_check_branch
          %238 = sbr.rel (%p236) target = $region48
        $region47: #{tpu_custom_call.1} parent=35 // pred_region
          %239 = dma.done [#allocation8], 2048
        $region48: #{tpu_custom_call.1} parent=35 // pred_fallthru
          _
        %s240 = sand.u32 %s42, 1
        %s241 = scalar_lea.sflag [#allocation5], %s240
        %s242 = sand.u32 %s42, 1
        %s243 = smul.addr %s242, 128
        %s244 = scalar_lea.vmem [#allocation4], %s243
        %p245 = pneg %p55
        %p246 = pneg %p52
        %p247 = pneg %p76
        %p248 = pneg %p73
        %p249 = pneg %p97
        %p250 = pneg %p94
        %p251 = pneg %p118
        %p252 = pneg %p115
        %p253 = pneg %p144
        %p254 = pneg %p141
        %s255 = smul.u32 4, %s25
        %p256 = scmp.eq.s32.totalorder %s25, 0
        // Predicated region
        $region49: #{tpu_custom_call.1} parent=35 // pred_check
          %p257 = pneg %p256
        $region50: #{tpu_custom_call.1} parent=35 // pred_check_branch
          %259 = sbr.rel (%p257) target = $region52
        $region51: #{tpu_custom_call.1} parent=35 // pred_region
          %260 = vst [vmem:[#allocation2] sm:$0xff] 0.0
          %261 = vst [vmem:[#allocation3] sm:$0xff] 0.0
        $region52: #{tpu_custom_call.1} parent=35 // pred_fallthru
          _
        %v262 = vld [vmem:[#allocation7] sm:$0xff]
        %v263 = vld [vmem:[#allocation7 + $0x8] sm:$0xff]
        %v264 = vld [vmem:[#allocation7 + $0x10] sm:$0xff]
        %v265 = vld [vmem:[#allocation7 + $0x18] sm:$0xff]
        %v266 = vld [vmem:[#allocation7 + $0x20] sm:$0xff]
        %v267 = vld [vmem:[#allocation7 + $0x28] sm:$0xff]
        %v268 = vld [vmem:[#allocation7 + $0x30] sm:$0xff]
        %v269 = vld [vmem:[#allocation7 + $0x38] sm:$0xff]
        %v270 = vld [vmem:[#allocation7 + $0x40] sm:$0xff]
        %v271 = vld [vmem:[#allocation7 + $0x48] sm:$0xff]
        %v272 = vld [vmem:[#allocation7 + $0x50] sm:$0xff]
        %v273 = vld [vmem:[#allocation7 + $0x58] sm:$0xff]
        %v274 = vld [vmem:[#allocation7 + $0x60] sm:$0xff]
        %v275 = vld [vmem:[#allocation7 + $0x68] sm:$0xff]
        %v276 = vld [vmem:[#allocation7 + $0x70] sm:$0xff]
        %v277 = vld [vmem:[#allocation7 + $0x78] sm:$0xff]
        %v278 = vld [vmem:[#allocation7 + $0x80] sm:$0xff]
        %v279 = vld [vmem:[#allocation7 + $0x88] sm:$0xff]
        %v280 = vld [vmem:[#allocation7 + $0x90] sm:$0xff]
        %v281 = vld [vmem:[#allocation7 + $0x98] sm:$0xff]
        %v282 = vld [vmem:[#allocation7 + $0xa0] sm:$0xff]
        %v283 = vld [vmem:[#allocation7 + $0xa8] sm:$0xff]
        %v284 = vld [vmem:[#allocation7 + $0xb0] sm:$0xff]
        %v285 = vld [vmem:[#allocation7 + $0xb8] sm:$0xff]
        %v286 = vld [vmem:[#allocation7 + $0xc0] sm:$0xff]
        %v287 = vld [vmem:[#allocation7 + $0xc8] sm:$0xff]
        %v288 = vld [vmem:[#allocation7 + $0xd0] sm:$0xff]
        %v289 = vld [vmem:[#allocation7 + $0xd8] sm:$0xff]
        %v290 = vld [vmem:[#allocation7 + $0xe0] sm:$0xff]
        %v291 = vld [vmem:[#allocation7 + $0xe8] sm:$0xff]
        %v292 = vld [vmem:[#allocation7 + $0xf0] sm:$0xff]
        %v293 = vld [vmem:[#allocation7 + $0xf8] sm:$0xff]
        %v294 = vld [vmem:[#allocation7 + $0x100] sm:$0xff]
        %v295 = vld [vmem:[#allocation7 + $0x108] sm:$0xff]
        %v296 = vld [vmem:[#allocation7 + $0x110] sm:$0xff]
        %v297 = vld [vmem:[#allocation7 + $0x118] sm:$0xff]
        %v298 = vld [vmem:[#allocation7 + $0x120] sm:$0xff]
        %v299 = vld [vmem:[#allocation7 + $0x128] sm:$0xff]
        %v300 = vld [vmem:[#allocation7 + $0x130] sm:$0xff]
        %v301 = vld [vmem:[#allocation7 + $0x138] sm:$0xff]
        %v302 = vld [vmem:[#allocation7 + $0x140] sm:$0xff]
        %v303 = vld [vmem:[#allocation7 + $0x148] sm:$0xff]
        %v304 = vld [vmem:[#allocation7 + $0x150] sm:$0xff]
        %v305 = vld [vmem:[#allocation7 + $0x158] sm:$0xff]
        %v306 = vld [vmem:[#allocation7 + $0x160] sm:$0xff]
        %v307 = vld [vmem:[#allocation7 + $0x168] sm:$0xff]
        %v308 = vld [vmem:[#allocation7 + $0x170] sm:$0xff]
        %v309 = vld [vmem:[#allocation7 + $0x178] sm:$0xff]
        %v310 = vld [vmem:[#allocation7 + $0x180] sm:$0xff]
        %v311 = vld [vmem:[#allocation7 + $0x188] sm:$0xff]
        %v312 = vld [vmem:[#allocation7 + $0x190] sm:$0xff]
        %v313 = vld [vmem:[#allocation7 + $0x198] sm:$0xff]
        %v314 = vld [vmem:[#allocation7 + $0x1a0] sm:$0xff]
        %v315 = vld [vmem:[#allocation7 + $0x1a8] sm:$0xff]
        %v316 = vld [vmem:[#allocation7 + $0x1b0] sm:$0xff]
        %v317 = vld [vmem:[#allocation7 + $0x1b8] sm:$0xff]
        %v318 = vld [vmem:[#allocation7 + $0x1c0] sm:$0xff]
        %v319 = vld [vmem:[#allocation7 + $0x1c8] sm:$0xff]
        %v320 = vld [vmem:[#allocation7 + $0x1d0] sm:$0xff]
        %v321 = vld [vmem:[#allocation7 + $0x1d8] sm:$0xff]
        %v322 = vld [vmem:[#allocation7 + $0x1e0] sm:$0xff]
        %v323 = vld [vmem:[#allocation7 + $0x1e8] sm:$0xff]
        %v324 = vld [vmem:[#allocation7 + $0x1f0] sm:$0xff]
        %v325 = vld [vmem:[#allocation7 + $0x1f8] sm:$0xff]
        %v326 = vld [vmem:[#allocation2] sm:$0xff]
        %v327 = vld [vmem:[#allocation3] sm:$0xff]
        %v328 = vld [vmem:[%s227] sm:$0xff]
        %v329 = vld [vmem:[%s227 + $0x8] sm:$0xff]
        %v330 = vld [vmem:[%s227 + $0x10] sm:$0xff]
        %v331 = vld [vmem:[%s227 + $0x18] sm:$0xff]
        %332 = vmatprep.subr.mxu0 %v323
        %333 = vmatpush1.msra.mxu0 %v322
        %334 = vmatprep.subr.mxu0 %v319
        %335 = vmatpush1.msra.mxu0 %v318
        %336 = vmatprep.subr.mxu0 %v315
        %337 = vmatpush1.msra.mxu0 %v314
        %338 = vmatprep.subr.mxu0 %v311
        %339 = vmatpush1.msra.mxu0 %v310
        %340 = vmatprep.subr.mxu0 %v307
        %341 = vmatpush1.msra.mxu0 %v306
        %342 = vmatprep.subr.mxu0 %v303
        %343 = vmatpush1.msra.mxu0 %v302
        %344 = vmatprep.subr.mxu0 %v299
        %345 = vmatpush1.msra.mxu0 %v298
        %346 = vmatprep.subr.mxu0 %v295
        %347 = vmatpush1.msra.mxu0 %v294
        %348 = vmatprep.subr.mxu0 %v291
        %349 = vmatpush1.msra.mxu0 %v290
        %350 = vmatprep.subr.mxu0 %v287
        %351 = vmatpush1.msra.mxu0 %v286
        %352 = vmatprep.subr.mxu0 %v283
        %353 = vmatpush1.msra.mxu0 %v282
        %354 = vmatprep.subr.mxu0 %v279
        %355 = vmatpush1.msra.mxu0 %v278
        %356 = vmatprep.subr.mxu0 %v275
        %357 = vmatpush1.msra.mxu0 %v274
        %358 = vmatprep.subr.mxu0 %v271
        %359 = vmatpush1.msra.mxu0 %v270
        %360 = vmatprep.subr.mxu0 %v267
        %361 = vmatpush1.msra.mxu0 %v266
        %362 = vmatprep.subr.mxu0 %v263
        %363 = vmatpush1.msra.mxu0 %v262
        %364 = vmatprep.subr.mxu0 0.0
        %365 = vmatpush2.msra.mxu0 0.0
        %366 = vmatprep.subr.mxu0 0.0
        %367 = vmatpush2.msra.mxu0 0.0
        %368 = vmatprep.subr.mxu0 0.0
        %369 = vmatpush2.msra.mxu0 0.0
        %370 = vmatprep.subr.mxu0 0.0
        %371 = vmatpush2.msra.mxu0 0.0
        %372 = vmatprep.subr.mxu0 0.0
        %373 = vmatpush2.msra.mxu0 0.0
        %374 = vmatprep.subr.mxu0 0.0
        %375 = vmatpush2.msra.mxu0 0.0
        %376 = vmatprep.subr.mxu0 0.0
        %377 = vmatpush2.msra.mxu0 0.0
        %378 = vmatprep.subr.mxu0 0.0
        %379 = vmatpush2.msra.mxu0 0.0
        %380 = vmatprep.subr.mxu0 0.0
        %381 = vmatpush2.msra.mxu0 0.0
        %382 = vmatprep.subr.mxu0 0.0
        %383 = vmatpush2.msra.mxu0 0.0
        %384 = vmatprep.subr.mxu0 0.0
        %385 = vmatpush2.msra.mxu0 0.0
        %386 = vmatprep.subr.mxu0 0.0
        %387 = vmatpush2.msra.mxu0 0.0
        %388 = vmatprep.subr.mxu0 0.0
        %389 = vmatpush2.msra.mxu0 0.0
        %390 = vmatprep.subr.mxu0 0.0
        %391 = vmatpush2.msra.mxu0 0.0
        %392 = vmatprep.subr.mxu0 0.0
        %393 = vmatpush2.msra.mxu0 0.0
        %394 = vmatprep.subr.mxu0 0.0
        %395 = vmatpush2.msra.mxu0 0.0
        %396 = vmatprep.mubr.f32.mxu0 0.0
        %397 = vmatmul.mubr.f32.gmra.mxu0 %v326
        %v398 = vpop.f32.mrf.mxu0
        %v399 = vadd.f32 0.0, %v398
        %v400 = vpop.f32.mrf.mxu0
        %v401 = vadd.f32 0.0, %v400
        %402 = vdwg.mxu0
        %403 = vmatprep.subr.mxu0 %v325
        %404 = vmatpush1.msra.mxu0 %v324
        %405 = vmatprep.subr.mxu0 %v321
        %406 = vmatpush1.msra.mxu0 %v320
        %407 = vmatprep.subr.mxu0 %v317
        %408 = vmatpush1.msra.mxu0 %v316
        %409 = vmatprep.subr.mxu0 %v313
        %410 = vmatpush1.msra.mxu0 %v312
        %411 = vmatprep.subr.mxu0 %v309
        %412 = vmatpush1.msra.mxu0 %v308
        %413 = vmatprep.subr.mxu0 %v305
        %414 = vmatpush1.msra.mxu0 %v304
        %415 = vmatprep.subr.mxu0 %v301
        %416 = vmatpush1.msra.mxu0 %v300
        %417 = vmatprep.subr.mxu0 %v297
        %418 = vmatpush1.msra.mxu0 %v296
        %419 = vmatprep.subr.mxu0 %v293
        %420 = vmatpush1.msra.mxu0 %v292
        %421 = vmatprep.subr.mxu0 %v289
        %422 = vmatpush1.msra.mxu0 %v288
        %423 = vmatprep.subr.mxu0 %v285
        %424 = vmatpush1.msra.mxu0 %v284
        %425 = vmatprep.subr.mxu0 %v281
        %426 = vmatpush1.msra.mxu0 %v280
        %427 = vmatprep.subr.mxu0 %v277
        %428 = vmatpush1.msra.mxu0 %v276
        %429 = vmatprep.subr.mxu0 %v273
        %430 = vmatpush1.msra.mxu0 %v272
        %431 = vmatprep.subr.mxu0 %v269
        %432 = vmatpush1.msra.mxu0 %v268
        %433 = vmatprep.subr.mxu0 %v265
        %434 = vmatpush1.msra.mxu0 %v264
        %435 = vmatprep.subr.mxu0 0.0
        %436 = vmatpush2.msra.mxu0 0.0
        %437 = vmatprep.subr.mxu0 0.0
        %438 = vmatpush2.msra.mxu0 0.0
        %439 = vmatprep.subr.mxu0 0.0
        %440 = vmatpush2.msra.mxu0 0.0
        %441 = vmatprep.subr.mxu0 0.0
        %442 = vmatpush2.msra.mxu0 0.0
        %443 = vmatprep.subr.mxu0 0.0
        %444 = vmatpush2.msra.mxu0 0.0
        %445 = vmatprep.subr.mxu0 0.0
        %446 = vmatpush2.msra.mxu0 0.0
        %447 = vmatprep.subr.mxu0 0.0
        %448 = vmatpush2.msra.mxu0 0.0
        %449 = vmatprep.subr.mxu0 0.0
        %450 = vmatpush2.msra.mxu0 0.0
        %451 = vmatprep.subr.mxu0 0.0
        %452 = vmatpush2.msra.mxu0 0.0
        %453 = vmatprep.subr.mxu0 0.0
        %454 = vmatpush2.msra.mxu0 0.0
        %455 = vmatprep.subr.mxu0 0.0
        %456 = vmatpush2.msra.mxu0 0.0
        %457 = vmatprep.subr.mxu0 0.0
        %458 = vmatpush2.msra.mxu0 0.0
        %459 = vmatprep.subr.mxu0 0.0
        %460 = vmatpush2.msra.mxu0 0.0
        %461 = vmatprep.subr.mxu0 0.0
        %462 = vmatpush2.msra.mxu0 0.0
        %463 = vmatprep.subr.mxu0 0.0
        %464 = vmatpush2.msra.mxu0 0.0
        %465 = vmatprep.subr.mxu0 0.0
        %466 = vmatpush2.msra.mxu0 0.0
        %467 = vmatprep.mubr.f32.mxu0 0.0
        %468 = vmatmul.mubr.f32.gmra.mxu0 %v326
        %v469 = vpop.f32.mrf.mxu0
        %v470 = vadd.f32 0.0, %v469
        %v471 = vpop.f32.mrf.mxu0
        %v472 = vadd.f32 0.0, %v471
        %473 = vdwg.mxu0
        %v474 = vadd.f32 %v328, %v399
        %v475 = vadd.f32 %v329, %v401
        %v476 = vadd.f32 %v330, %v470
        %v477 = vadd.f32 %v331, %v472
        %v478 = vxor.u32 %v474, 2147483648
        %v479 = vmul.f32 %v478, 1.442695
        %v480 = vpow.pop %v479
        %v481 = vadd.f32 %v480, 1.0
        %v482 = vrcp.pop %v481
        %v483 = vmul.f32 1.0, %v482
        %v484 = vxor.u32 %v475, 2147483648
        %v485 = vmul.f32 %v484, 1.442695
        %v486 = vpow.pop %v485
        %v487 = vadd.f32 %v486, 1.0
        %v488 = vrcp.pop %v487
        %v489 = vmul.f32 1.0, %v488
        %v490 = vtanh.pop %v476
        %v491 = vxor.u32 %v477, 2147483648
        %v492 = vmul.f32 %v491, 1.442695
        %v493 = vpow.pop %v492
        %v494 = vadd.f32 %v493, 1.0
        %v495 = vrcp.pop %v494
        %v496 = vmul.f32 1.0, %v495
        %v497 = vmul.f32 %v489, %v327
        %v498 = vmul.f32 %v483, %v490
        %v499 = vadd.f32 %v497, %v498
        %v500 = vtanh.pop %v499
        %v501 = vmul.f32 %v496, %v500
        %s502 = scalar_lea.vmem %s227, 32 [#allocation4]
        %v503 = vld [vmem:[%s502] sm:$0xff]
        %v504 = vld [vmem:[%s502 + $0x8] sm:$0xff]
        %v505 = vld [vmem:[%s502 + $0x10] sm:$0xff]
        %v506 = vld [vmem:[%s502 + $0x18] sm:$0xff]
        %507 = vmatprep.subr.mxu0 %v323
        %508 = vmatpush1.msra.mxu0 %v322
        %509 = vmatprep.subr.mxu0 %v319
        %510 = vmatpush1.msra.mxu0 %v318
        %511 = vmatprep.subr.mxu0 %v315
        %512 = vmatpush1.msra.mxu0 %v314
        %513 = vmatprep.subr.mxu0 %v311
        %514 = vmatpush1.msra.mxu0 %v310
        %515 = vmatprep.subr.mxu0 %v307
        %516 = vmatpush1.msra.mxu0 %v306
        %517 = vmatprep.subr.mxu0 %v303
        %518 = vmatpush1.msra.mxu0 %v302
        %519 = vmatprep.subr.mxu0 %v299
        %520 = vmatpush1.msra.mxu0 %v298
        %521 = vmatprep.subr.mxu0 %v295
        %522 = vmatpush1.msra.mxu0 %v294
        %523 = vmatprep.subr.mxu0 %v291
        %524 = vmatpush1.msra.mxu0 %v290
        %525 = vmatprep.subr.mxu0 %v287
        %526 = vmatpush1.msra.mxu0 %v286
        %527 = vmatprep.subr.mxu0 %v283
        %528 = vmatpush1.msra.mxu0 %v282
        %529 = vmatprep.subr.mxu0 %v279
        %530 = vmatpush1.msra.mxu0 %v278
        %531 = vmatprep.subr.mxu0 %v275
        %532 = vmatpush1.msra.mxu0 %v274
        %533 = vmatprep.subr.mxu0 %v271
        %534 = vmatpush1.msra.mxu0 %v270
        %535 = vmatprep.subr.mxu0 %v267
        %536 = vmatpush1.msra.mxu0 %v266
        %537 = vmatprep.subr.mxu0 %v263
        %538 = vmatpush1.msra.mxu0 %v262
        %539 = vmatprep.subr.mxu0 0.0
        %540 = vmatpush2.msra.mxu0 0.0
        %541 = vmatprep.subr.mxu0 0.0
        %542 = vmatpush2.msra.mxu0 0.0
        %543 = vmatprep.subr.mxu0 0.0
        %544 = vmatpush2.msra.mxu0 0.0
        %545 = vmatprep.subr.mxu0 0.0
        %546 = vmatpush2.msra.mxu0 0.0
        %547 = vmatprep.subr.mxu0 0.0
        %548 = vmatpush2.msra.mxu0 0.0
        %549 = vmatprep.subr.mxu0 0.0
        %550 = vmatpush2.msra.mxu0 0.0
        %551 = vmatprep.subr.mxu0 0.0
        %552 = vmatpush2.msra.mxu0 0.0
        %553 = vmatprep.subr.mxu0 0.0
        %554 = vmatpush2.msra.mxu0 0.0
        %555 = vmatprep.subr.mxu0 0.0
        %556 = vmatpush2.msra.mxu0 0.0
        %557 = vmatprep.subr.mxu0 0.0
        %558 = vmatpush2.msra.mxu0 0.0
        %559 = vmatprep.subr.mxu0 0.0
        %560 = vmatpush2.msra.mxu0 0.0
        %561 = vmatprep.subr.mxu0 0.0
        %562 = vmatpush2.msra.mxu0 0.0
        %563 = vmatprep.subr.mxu0 0.0
        %564 = vmatpush2.msra.mxu0 0.0
        %565 = vmatprep.subr.mxu0 0.0
        %566 = vmatpush2.msra.mxu0 0.0
        %567 = vmatprep.subr.mxu0 0.0
        %568 = vmatpush2.msra.mxu0 0.0
        %569 = vmatprep.subr.mxu0 0.0
        %570 = vmatpush2.msra.mxu0 0.0
        %571 = vmatprep.mubr.f32.mxu0 0.0
        %572 = vmatmul.mubr.f32.gmra.mxu0 %v501
        %v573 = vpop.f32.mrf.mxu0
        %v574 = vadd.f32 0.0, %v573
        %v575 = vpop.f32.mrf.mxu0
        %v576 = vadd.f32 0.0, %v575
        %577 = vdwg.mxu0
        %578 = vmatprep.subr.mxu0 %v325
        %579 = vmatpush1.msra.mxu0 %v324
        %580 = vmatprep.subr.mxu0 %v321
        %581 = vmatpush1.msra.mxu0 %v320
        %582 = vmatprep.subr.mxu0 %v317
        %583 = vmatpush1.msra.mxu0 %v316
        %584 = vmatprep.subr.mxu0 %v313
        %585 = vmatpush1.msra.mxu0 %v312
        %586 = vmatprep.subr.mxu0 %v309
        %587 = vmatpush1.msra.mxu0 %v308
        %588 = vmatprep.subr.mxu0 %v305
        %589 = vmatpush1.msra.mxu0 %v304
        %590 = vmatprep.subr.mxu0 %v301
        %591 = vmatpush1.msra.mxu0 %v300
        %592 = vmatprep.subr.mxu0 %v297
        %593 = vmatpush1.msra.mxu0 %v296
        %594 = vmatprep.subr.mxu0 %v293
        %595 = vmatpush1.msra.mxu0 %v292
        %596 = vmatprep.subr.mxu0 %v289
        %597 = vmatpush1.msra.mxu0 %v288
        %598 = vmatprep.subr.mxu0 %v285
        %599 = vmatpush1.msra.mxu0 %v284
        %600 = vmatprep.subr.mxu0 %v281
        %601 = vmatpush1.msra.mxu0 %v280
        %602 = vmatprep.subr.mxu0 %v277
        %603 = vmatpush1.msra.mxu0 %v276
        %604 = vmatprep.subr.mxu0 %v273
        %605 = vmatpush1.msra.mxu0 %v272
        %606 = vmatprep.subr.mxu0 %v269
        %607 = vmatpush1.msra.mxu0 %v268
        %608 = vmatprep.subr.mxu0 %v265
        %609 = vmatpush1.msra.mxu0 %v264
        %610 = vmatprep.subr.mxu0 0.0
        %611 = vmatpush2.msra.mxu0 0.0
        %612 = vmatprep.subr.mxu0 0.0
        %613 = vmatpush2.msra.mxu0 0.0
        %614 = vmatprep.subr.mxu0 0.0
        %615 = vmatpush2.msra.mxu0 0.0
        %616 = vmatprep.subr.mxu0 0.0
        %617 = vmatpush2.msra.mxu0 0.0
        %618 = vmatprep.subr.mxu0 0.0
        %619 = vmatpush2.msra.mxu0 0.0
        %620 = vmatprep.subr.mxu0 0.0
        %621 = vmatpush2.msra.mxu0 0.0
        %622 = vmatprep.subr.mxu0 0.0
        %623 = vmatpush2.msra.mxu0 0.0
        %624 = vmatprep.subr.mxu0 0.0
        %625 = vmatpush2.msra.mxu0 0.0
        %626 = vmatprep.subr.mxu0 0.0
        %627 = vmatpush2.msra.mxu0 0.0
        %628 = vmatprep.subr.mxu0 0.0
        %629 = vmatpush2.msra.mxu0 0.0
        %630 = vmatprep.subr.mxu0 0.0
        %631 = vmatpush2.msra.mxu0 0.0
        %632 = vmatprep.subr.mxu0 0.0
        %633 = vmatpush2.msra.mxu0 0.0
        %634 = vmatprep.subr.mxu0 0.0
        %635 = vmatpush2.msra.mxu0 0.0
        %636 = vmatprep.subr.mxu0 0.0
        %637 = vmatpush2.msra.mxu0 0.0
        %638 = vmatprep.subr.mxu0 0.0
        %639 = vmatpush2.msra.mxu0 0.0
        %640 = vmatprep.subr.mxu0 0.0
        %641 = vmatpush2.msra.mxu0 0.0
        %642 = vmatprep.mubr.f32.mxu0 0.0
        %643 = vmatmul.mubr.f32.gmra.mxu0 %v501
        %v644 = vpop.f32.mrf.mxu0
        %v645 = vadd.f32 0.0, %v644
        %v646 = vpop.f32.mrf.mxu0
        %v647 = vadd.f32 0.0, %v646
        %648 = vdwg.mxu0
        %v649 = vadd.f32 %v503, %v574
        %v650 = vadd.f32 %v504, %v576
        %v651 = vadd.f32 %v505, %v645
        %v652 = vadd.f32 %v506, %v647
        %v653 = vxor.u32 %v649, 2147483648
        %v654 = vmul.f32 %v653, 1.442695
        %v655 = vpow.pop %v654
        %v656 = vadd.f32 %v655, 1.0
        %v657 = vrcp.pop %v656
        %v658 = vmul.f32 1.0, %v657
        %v659 = vxor.u32 %v650, 2147483648
        %v660 = vmul.f32 %v659, 1.442695
        %v661 = vpow.pop %v660
        %v662 = vadd.f32 %v661, 1.0
        %v663 = vrcp.pop %v662
        %v664 = vmul.f32 1.0, %v663
        %v665 = vtanh.pop %v651
        %v666 = vxor.u32 %v652, 2147483648
        %v667 = vmul.f32 %v666, 1.442695
        %v668 = vpow.pop %v667
        %v669 = vadd.f32 %v668, 1.0
        %v670 = vrcp.pop %v669
        %v671 = vmul.f32 1.0, %v670
        %v672 = vmul.f32 %v664, %v499
        %v673 = vmul.f32 %v658, %v665
        %v674 = vadd.f32 %v672, %v673
        %v675 = vtanh.pop %v674
        %v676 = vmul.f32 %v671, %v675
        %s677 = scalar_lea.vmem %s227, 64 [#allocation4]
        %v678 = vld [vmem:[%s677] sm:$0xff]
        %v679 = vld [vmem:[%s677 + $0x8] sm:$0xff]
        %v680 = vld [vmem:[%s677 + $0x10] sm:$0xff]
        %v681 = vld [vmem:[%s677 + $0x18] sm:$0xff]
        %682 = vmatprep.subr.mxu0 %v323
        %683 = vmatpush1.msra.mxu0 %v322
        %684 = vmatprep.subr.mxu0 %v319
        %685 = vmatpush1.msra.mxu0 %v318
        %686 = vmatprep.subr.mxu0 %v315
        %687 = vmatpush1.msra.mxu0 %v314
        %688 = vmatprep.subr.mxu0 %v311
        %689 = vmatpush1.msra.mxu0 %v310
        %690 = vmatprep.subr.mxu0 %v307
        %691 = vmatpush1.msra.mxu0 %v306
        %692 = vmatprep.subr.mxu0 %v303
        %693 = vmatpush1.msra.mxu0 %v302
        %694 = vmatprep.subr.mxu0 %v299
        %695 = vmatpush1.msra.mxu0 %v298
        %696 = vmatprep.subr.mxu0 %v295
        %697 = vmatpush1.msra.mxu0 %v294
        %698 = vmatprep.subr.mxu0 %v291
        %699 = vmatpush1.msra.mxu0 %v290
        %700 = vmatprep.subr.mxu0 %v287
        %701 = vmatpush1.msra.mxu0 %v286
        %702 = vmatprep.subr.mxu0 %v283
        %703 = vmatpush1.msra.mxu0 %v282
        %704 = vmatprep.subr.mxu0 %v279
        %705 = vmatpush1.msra.mxu0 %v278
        %706 = vmatprep.subr.mxu0 %v275
        %707 = vmatpush1.msra.mxu0 %v274
        %708 = vmatprep.subr.mxu0 %v271
        %709 = vmatpush1.msra.mxu0 %v270
        %710 = vmatprep.subr.mxu0 %v267
        %711 = vmatpush1.msra.mxu0 %v266
        %712 = vmatprep.subr.mxu0 %v263
        %713 = vmatpush1.msra.mxu0 %v262
        %714 = vmatprep.subr.mxu0 0.0
        %715 = vmatpush2.msra.mxu0 0.0
        %716 = vmatprep.subr.mxu0 0.0
        %717 = vmatpush2.msra.mxu0 0.0
        %718 = vmatprep.subr.mxu0 0.0
        %719 = vmatpush2.msra.mxu0 0.0
        %720 = vmatprep.subr.mxu0 0.0
        %721 = vmatpush2.msra.mxu0 0.0
        %722 = vmatprep.subr.mxu0 0.0
        %723 = vmatpush2.msra.mxu0 0.0
        %724 = vmatprep.subr.mxu0 0.0
        %725 = vmatpush2.msra.mxu0 0.0
        %726 = vmatprep.subr.mxu0 0.0
        %727 = vmatpush2.msra.mxu0 0.0
        %728 = vmatprep.subr.mxu0 0.0
        %729 = vmatpush2.msra.mxu0 0.0
        %730 = vmatprep.subr.mxu0 0.0
        %731 = vmatpush2.msra.mxu0 0.0
        %732 = vmatprep.subr.mxu0 0.0
        %733 = vmatpush2.msra.mxu0 0.0
        %734 = vmatprep.subr.mxu0 0.0
        %735 = vmatpush2.msra.mxu0 0.0
        %736 = vmatprep.subr.mxu0 0.0
        %737 = vmatpush2.msra.mxu0 0.0
        %738 = vmatprep.subr.mxu0 0.0
        %739 = vmatpush2.msra.mxu0 0.0
        %740 = vmatprep.subr.mxu0 0.0
        %741 = vmatpush2.msra.mxu0 0.0
        %742 = vmatprep.subr.mxu0 0.0
        %743 = vmatpush2.msra.mxu0 0.0
        %744 = vmatprep.subr.mxu0 0.0
        %745 = vmatpush2.msra.mxu0 0.0
        %746 = vmatprep.mubr.f32.mxu0 0.0
        %747 = vmatmul.mubr.f32.gmra.mxu0 %v676
        %v748 = vpop.f32.mrf.mxu0
        %v749 = vadd.f32 0.0, %v748
        %v750 = vpop.f32.mrf.mxu0
        %v751 = vadd.f32 0.0, %v750
        %752 = vdwg.mxu0
        %753 = vmatprep.subr.mxu0 %v325
        %754 = vmatpush1.msra.mxu0 %v324
        %755 = vmatprep.subr.mxu0 %v321
        %756 = vmatpush1.msra.mxu0 %v320
        %757 = vmatprep.subr.mxu0 %v317
        %758 = vmatpush1.msra.mxu0 %v316
        %759 = vmatprep.subr.mxu0 %v313
        %760 = vmatpush1.msra.mxu0 %v312
        %761 = vmatprep.subr.mxu0 %v309
        %762 = vmatpush1.msra.mxu0 %v308
        %763 = vmatprep.subr.mxu0 %v305
        %764 = vmatpush1.msra.mxu0 %v304
        %765 = vmatprep.subr.mxu0 %v301
        %766 = vmatpush1.msra.mxu0 %v300
        %767 = vmatprep.subr.mxu0 %v297
        %768 = vmatpush1.msra.mxu0 %v296
        %769 = vmatprep.subr.mxu0 %v293
        %770 = vmatpush1.msra.mxu0 %v292
        %771 = vmatprep.subr.mxu0 %v289
        %772 = vmatpush1.msra.mxu0 %v288
        %773 = vmatprep.subr.mxu0 %v285
        %774 = vmatpush1.msra.mxu0 %v284
        %775 = vmatprep.subr.mxu0 %v281
        %776 = vmatpush1.msra.mxu0 %v280
        %777 = vmatprep.subr.mxu0 %v277
        %778 = vmatpush1.msra.mxu0 %v276
        %779 = vmatprep.subr.mxu0 %v273
        %780 = vmatpush1.msra.mxu0 %v272
        %781 = vmatprep.subr.mxu0 %v269
        %782 = vmatpush1.msra.mxu0 %v268
        %783 = vmatprep.subr.mxu0 %v265
        %784 = vmatpush1.msra.mxu0 %v264
        %785 = vmatprep.subr.mxu0 0.0
        %786 = vmatpush2.msra.mxu0 0.0
        %787 = vmatprep.subr.mxu0 0.0
        %788 = vmatpush2.msra.mxu0 0.0
        %789 = vmatprep.subr.mxu0 0.0
        %790 = vmatpush2.msra.mxu0 0.0
        %791 = vmatprep.subr.mxu0 0.0
        %792 = vmatpush2.msra.mxu0 0.0
        %793 = vmatprep.subr.mxu0 0.0
        %794 = vmatpush2.msra.mxu0 0.0
        %795 = vmatprep.subr.mxu0 0.0
        %796 = vmatpush2.msra.mxu0 0.0
        %797 = vmatprep.subr.mxu0 0.0
        %798 = vmatpush2.msra.mxu0 0.0
        %799 = vmatprep.subr.mxu0 0.0
        %800 = vmatpush2.msra.mxu0 0.0
        %801 = vmatprep.subr.mxu0 0.0
        %802 = vmatpush2.msra.mxu0 0.0
        %803 = vmatprep.subr.mxu0 0.0
        %804 = vmatpush2.msra.mxu0 0.0
        %805 = vmatprep.subr.mxu0 0.0
        %806 = vmatpush2.msra.mxu0 0.0
        %807 = vmatprep.subr.mxu0 0.0
        %808 = vmatpush2.msra.mxu0 0.0
        %809 = vmatprep.subr.mxu0 0.0
        %810 = vmatpush2.msra.mxu0 0.0
        %811 = vmatprep.subr.mxu0 0.0
        %812 = vmatpush2.msra.mxu0 0.0
        %813 = vmatprep.subr.mxu0 0.0
        %814 = vmatpush2.msra.mxu0 0.0
        %815 = vmatprep.subr.mxu0 0.0
        %816 = vmatpush2.msra.mxu0 0.0
        %817 = vmatprep.mubr.f32.mxu0 0.0
        %818 = vmatmul.mubr.f32.gmra.mxu0 %v676
        %v819 = vpop.f32.mrf.mxu0
        %v820 = vadd.f32 0.0, %v819
        %v821 = vpop.f32.mrf.mxu0
        %v822 = vadd.f32 0.0, %v821
        %823 = vdwg.mxu0
        %v824 = vadd.f32 %v678, %v749
        %v825 = vadd.f32 %v679, %v751
        %v826 = vadd.f32 %v680, %v820
        %v827 = vadd.f32 %v681, %v822
        %v828 = vxor.u32 %v824, 2147483648
        %v829 = vmul.f32 %v828, 1.442695
        %v830 = vpow.pop %v829
        %v831 = vadd.f32 %v830, 1.0
        %v832 = vrcp.pop %v831
        %v833 = vmul.f32 1.0, %v832
        %v834 = vxor.u32 %v825, 2147483648
        %v835 = vmul.f32 %v834, 1.442695
        %v836 = vpow.pop %v835
        %v837 = vadd.f32 %v836, 1.0
        %v838 = vrcp.pop %v837
        %v839 = vmul.f32 1.0, %v838
        %v840 = vtanh.pop %v826
        %v841 = vxor.u32 %v827, 2147483648
        %v842 = vmul.f32 %v841, 1.442695
        %v843 = vpow.pop %v842
        %v844 = vadd.f32 %v843, 1.0
        %v845 = vrcp.pop %v844
        %v846 = vmul.f32 1.0, %v845
        %v847 = vmul.f32 %v839, %v674
        %v848 = vmul.f32 %v833, %v840
        %v849 = vadd.f32 %v847, %v848
        %v850 = vtanh.pop %v849
        %v851 = vmul.f32 %v846, %v850
        %s852 = scalar_lea.vmem %s227, 96 [#allocation4]
        %v853 = vld [vmem:[%s852] sm:$0xff]
        %v854 = vld [vmem:[%s852 + $0x8] sm:$0xff]
        %v855 = vld [vmem:[%s852 + $0x10] sm:$0xff]
        %v856 = vld [vmem:[%s852 + $0x18] sm:$0xff]
        %857 = vmatprep.subr.mxu0 %v323
        %858 = vmatpush1.msra.mxu0 %v322
        %859 = vmatprep.subr.mxu0 %v319
        %860 = vmatpush1.msra.mxu0 %v318
        %861 = vmatprep.subr.mxu0 %v315
        %862 = vmatpush1.msra.mxu0 %v314
        %863 = vmatprep.subr.mxu0 %v311
        %864 = vmatpush1.msra.mxu0 %v310
        %865 = vmatprep.subr.mxu0 %v307
        %866 = vmatpush1.msra.mxu0 %v306
        %867 = vmatprep.subr.mxu0 %v303
        %868 = vmatpush1.msra.mxu0 %v302
        %869 = vmatprep.subr.mxu0 %v299
        %870 = vmatpush1.msra.mxu0 %v298
        %871 = vmatprep.subr.mxu0 %v295
        %872 = vmatpush1.msra.mxu0 %v294
        %873 = vmatprep.subr.mxu0 %v291
        %874 = vmatpush1.msra.mxu0 %v290
        %875 = vmatprep.subr.mxu0 %v287
        %876 = vmatpush1.msra.mxu0 %v286
        %877 = vmatprep.subr.mxu0 %v283
        %878 = vmatpush1.msra.mxu0 %v282
        %879 = vmatprep.subr.mxu0 %v279
        %880 = vmatpush1.msra.mxu0 %v278
        %881 = vmatprep.subr.mxu0 %v275
        %882 = vmatpush1.msra.mxu0 %v274
        %883 = vmatprep.subr.mxu0 %v271
        %884 = vmatpush1.msra.mxu0 %v270
        %885 = vmatprep.subr.mxu0 %v267
        %886 = vmatpush1.msra.mxu0 %v266
        %887 = vmatprep.subr.mxu0 %v263
        %888 = vmatpush1.msra.mxu0 %v262
        %889 = vmatprep.subr.mxu0 0.0
        %890 = vmatpush2.msra.mxu0 0.0
        %891 = vmatprep.subr.mxu0 0.0
        %892 = vmatpush2.msra.mxu0 0.0
        %893 = vmatprep.subr.mxu0 0.0
        %894 = vmatpush2.msra.mxu0 0.0
        %895 = vmatprep.subr.mxu0 0.0
        %896 = vmatpush2.msra.mxu0 0.0
        %897 = vmatprep.subr.mxu0 0.0
        %898 = vmatpush2.msra.mxu0 0.0
        %899 = vmatprep.subr.mxu0 0.0
        %900 = vmatpush2.msra.mxu0 0.0
        %901 = vmatprep.subr.mxu0 0.0
        %902 = vmatpush2.msra.mxu0 0.0
        %903 = vmatprep.subr.mxu0 0.0
        %904 = vmatpush2.msra.mxu0 0.0
        %905 = vmatprep.subr.mxu0 0.0
        %906 = vmatpush2.msra.mxu0 0.0
        %907 = vmatprep.subr.mxu0 0.0
        %908 = vmatpush2.msra.mxu0 0.0
        %909 = vmatprep.subr.mxu0 0.0
        %910 = vmatpush2.msra.mxu0 0.0
        %911 = vmatprep.subr.mxu0 0.0
        %912 = vmatpush2.msra.mxu0 0.0
        %913 = vmatprep.subr.mxu0 0.0
        %914 = vmatpush2.msra.mxu0 0.0
        %915 = vmatprep.subr.mxu0 0.0
        %916 = vmatpush2.msra.mxu0 0.0
        %917 = vmatprep.subr.mxu0 0.0
        %918 = vmatpush2.msra.mxu0 0.0
        %919 = vmatprep.subr.mxu0 0.0
        %920 = vmatpush2.msra.mxu0 0.0
        %921 = vmatprep.mubr.f32.mxu0 0.0
        %922 = vmatmul.mubr.f32.gmra.mxu0 %v851
        %v923 = vpop.f32.mrf.mxu0
        %v924 = vadd.f32 0.0, %v923
        %v925 = vpop.f32.mrf.mxu0
        %v926 = vadd.f32 0.0, %v925
        %927 = vdwg.mxu0
        %928 = vmatprep.subr.mxu0 %v325
        %929 = vmatpush1.msra.mxu0 %v324
        %930 = vmatprep.subr.mxu0 %v321
        %931 = vmatpush1.msra.mxu0 %v320
        %932 = vmatprep.subr.mxu0 %v317
        %933 = vmatpush1.msra.mxu0 %v316
        %934 = vmatprep.subr.mxu0 %v313
        %935 = vmatpush1.msra.mxu0 %v312
        %936 = vmatprep.subr.mxu0 %v309
        %937 = vmatpush1.msra.mxu0 %v308
        %938 = vmatprep.subr.mxu0 %v305
        %939 = vmatpush1.msra.mxu0 %v304
        %940 = vmatprep.subr.mxu0 %v301
        %941 = vmatpush1.msra.mxu0 %v300
        %942 = vmatprep.subr.mxu0 %v297
        %943 = vmatpush1.msra.mxu0 %v296
        %944 = vmatprep.subr.mxu0 %v293
        %945 = vmatpush1.msra.mxu0 %v292
        %946 = vmatprep.subr.mxu0 %v289
        %947 = vmatpush1.msra.mxu0 %v288
        %948 = vmatprep.subr.mxu0 %v285
        %949 = vmatpush1.msra.mxu0 %v284
        %950 = vmatprep.subr.mxu0 %v281
        %951 = vmatpush1.msra.mxu0 %v280
        %952 = vmatprep.subr.mxu0 %v277
        %953 = vmatpush1.msra.mxu0 %v276
        %954 = vmatprep.subr.mxu0 %v273
        %955 = vmatpush1.msra.mxu0 %v272
        %956 = vmatprep.subr.mxu0 %v269
        %957 = vmatpush1.msra.mxu0 %v268
        %958 = vmatprep.subr.mxu0 %v265
        %959 = vmatpush1.msra.mxu0 %v264
        %960 = vmatprep.subr.mxu0 0.0
        %961 = vmatpush2.msra.mxu0 0.0
        %962 = vmatprep.subr.mxu0 0.0
        %963 = vmatpush2.msra.mxu0 0.0
        %964 = vmatprep.subr.mxu0 0.0
        %965 = vmatpush2.msra.mxu0 0.0
        %966 = vmatprep.subr.mxu0 0.0
        %967 = vmatpush2.msra.mxu0 0.0
        %968 = vmatprep.subr.mxu0 0.0
        %969 = vmatpush2.msra.mxu0 0.0
        %970 = vmatprep.subr.mxu0 0.0
        %971 = vmatpush2.msra.mxu0 0.0
        %972 = vmatprep.subr.mxu0 0.0
        %973 = vmatpush2.msra.mxu0 0.0
        %974 = vmatprep.subr.mxu0 0.0
        %975 = vmatpush2.msra.mxu0 0.0
        %976 = vmatprep.subr.mxu0 0.0
        %977 = vmatpush2.msra.mxu0 0.0
        %978 = vmatprep.subr.mxu0 0.0
        %979 = vmatpush2.msra.mxu0 0.0
        %980 = vmatprep.subr.mxu0 0.0
        %981 = vmatpush2.msra.mxu0 0.0
        %982 = vmatprep.subr.mxu0 0.0
        %983 = vmatpush2.msra.mxu0 0.0
        %984 = vmatprep.subr.mxu0 0.0
        %985 = vmatpush2.msra.mxu0 0.0
        %986 = vmatprep.subr.mxu0 0.0
        %987 = vmatpush2.msra.mxu0 0.0
        %988 = vmatprep.subr.mxu0 0.0
        %989 = vmatpush2.msra.mxu0 0.0
        %990 = vmatprep.subr.mxu0 0.0
        %991 = vmatpush2.msra.mxu0 0.0
        %992 = vmatprep.mubr.f32.mxu0 0.0
        %993 = vmatmul.mubr.f32.gmra.mxu0 %v851
        %v994 = vpop.f32.mrf.mxu0
        %v995 = vadd.f32 0.0, %v994
        %v996 = vpop.f32.mrf.mxu0
        %v997 = vadd.f32 0.0, %v996
        %998 = vdwg.mxu0
        %v999 = vadd.f32 %v853, %v924
        %v1000 = vadd.f32 %v854, %v926
        %v1001 = vadd.f32 %v855, %v995
        %v1002 = vadd.f32 %v856, %v997
        %v1003 = vxor.u32 %v999, 2147483648
        %v1004 = vmul.f32 %v1003, 1.442695
        %v1005 = vpow.pop %v1004
        %v1006 = vadd.f32 %v1005, 1.0
        %v1007 = vrcp.pop %v1006
        %v1008 = vmul.f32 1.0, %v1007
        %v1009 = vxor.u32 %v1000, 2147483648
        %v1010 = vmul.f32 %v1009, 1.442695
        %v1011 = vpow.pop %v1010
        %v1012 = vadd.f32 %v1011, 1.0
        %v1013 = vrcp.pop %v1012
        %v1014 = vmul.f32 1.0, %v1013
        %v1015 = vtanh.pop %v1001
        %v1016 = vxor.u32 %v1002, 2147483648
        %v1017 = vmul.f32 %v1016, 1.442695
        %v1018 = vpow.pop %v1017
        %v1019 = vadd.f32 %v1018, 1.0
        %v1020 = vrcp.pop %v1019
        %v1021 = vmul.f32 1.0, %v1020
        %v1022 = vmul.f32 %v1014, %v849
        %v1023 = vmul.f32 %v1008, %v1015
        %v1024 = vadd.f32 %v1022, %v1023
        %v1025 = vtanh.pop %v1024
        %v1026 = vmul.f32 %v1021, %v1025
        %1027 = vst [vmem:[#allocation2] sm:$0xff] %v1026
        %1028 = vst [vmem:[#allocation3] sm:$0xff] %v1024
        %p1029 = scmp.eq.s32.totalorder %s25, 1
        // Predicated region
        $region53: #{tpu_custom_call.1} parent=35 // pred_check
          %p1030 = pneg %p1029
        $region54: #{tpu_custom_call.1} parent=35 // pred_check_branch
          %1032 = sbr.rel (%p1030) target = $region56
        $region55: #{tpu_custom_call.1} parent=35 // pred_region
          %v1033 = vld [vmem:[#allocation9] sm:$0xff]
          %v1034 = vld [vmem:[#allocation9 + $0x8] sm:$0xff]
          %v1035 = vld [vmem:[#allocation9 + $0x10] sm:$0xff]
          %v1036 = vld [vmem:[#allocation9 + $0x18] sm:$0xff]
          %v1037 = vld [vmem:[#allocation9 + $0x20] sm:$0xff]
          %v1038 = vld [vmem:[#allocation9 + $0x28] sm:$0xff]
          %v1039 = vld [vmem:[#allocation9 + $0x30] sm:$0xff]
          %v1040 = vld [vmem:[#allocation9 + $0x38] sm:$0xff]
          %v1041 = vld [vmem:[#allocation9 + $0x40] sm:$0xff]
          %v1042 = vld [vmem:[#allocation9 + $0x48] sm:$0xff]
          %v1043 = vld [vmem:[#allocation9 + $0x50] sm:$0xff]
          %v1044 = vld [vmem:[#allocation9 + $0x58] sm:$0xff]
          %v1045 = vld [vmem:[#allocation9 + $0x60] sm:$0xff]
          %v1046 = vld [vmem:[#allocation9 + $0x68] sm:$0xff]
          %v1047 = vld [vmem:[#allocation9 + $0x70] sm:$0xff]
          %v1048 = vld [vmem:[#allocation9 + $0x78] sm:$0xff]
          %v1049 = vld [vmem:[%s3] sm:$0x1]
          %v1051 = vlaneseq
          %v1052 = vshrl.u32 %v1051, 7
          %v1053 = vsub.s32 0, %v1052
          %v1054 = vrot.slane %v1049, %v1053
          %1056 = vmatprep.subr.mxu0 0.0
          %1057 = vmatpush1.msra.mxu0 %v1048
          %1058 = vmatprep.subr.mxu0 0.0
          %1059 = vmatpush1.msra.mxu0 %v1047
          %1060 = vmatprep.subr.mxu0 0.0
          %1061 = vmatpush1.msra.mxu0 %v1046
          %1062 = vmatprep.subr.mxu0 0.0
          %1063 = vmatpush1.msra.mxu0 %v1045
          %1064 = vmatprep.subr.mxu0 0.0
          %1065 = vmatpush1.msra.mxu0 %v1044
          %1066 = vmatprep.subr.mxu0 0.0
          %1067 = vmatpush1.msra.mxu0 %v1043
          %1068 = vmatprep.subr.mxu0 0.0
          %1069 = vmatpush1.msra.mxu0 %v1042
          %1070 = vmatprep.subr.mxu0 0.0
          %1071 = vmatpush1.msra.mxu0 %v1041
          %1072 = vmatprep.subr.mxu0 0.0
          %1073 = vmatpush1.msra.mxu0 %v1040
          %1074 = vmatprep.subr.mxu0 0.0
          %1075 = vmatpush1.msra.mxu0 %v1039
          %1076 = vmatprep.subr.mxu0 0.0
          %1077 = vmatpush1.msra.mxu0 %v1038
          %1078 = vmatprep.subr.mxu0 0.0
          %1079 = vmatpush1.msra.mxu0 %v1037
          %1080 = vmatprep.subr.mxu0 0.0
          %1081 = vmatpush1.msra.mxu0 %v1036
          %1082 = vmatprep.subr.mxu0 0.0
          %1083 = vmatpush1.msra.mxu0 %v1035
          %1084 = vmatprep.subr.mxu0 0.0
          %1085 = vmatpush1.msra.mxu0 %v1034
          %1086 = vmatprep.subr.mxu0 0.0
          %1087 = vmatpush1.msra.mxu0 %v1033
          %1088 = vmatprep.subr.mxu0 0.0
          %1089 = vmatpush2.msra.mxu0 0.0
          %1090 = vmatprep.subr.mxu0 0.0
          %1091 = vmatpush2.msra.mxu0 0.0
          %1092 = vmatprep.subr.mxu0 0.0
          %1093 = vmatpush2.msra.mxu0 0.0
          %1094 = vmatprep.subr.mxu0 0.0
          %1095 = vmatpush2.msra.mxu0 0.0
          %1096 = vmatprep.subr.mxu0 0.0
          %1097 = vmatpush2.msra.mxu0 0.0
          %1098 = vmatprep.subr.mxu0 0.0
          %1099 = vmatpush2.msra.mxu0 0.0
          %1100 = vmatprep.subr.mxu0 0.0
          %1101 = vmatpush2.msra.mxu0 0.0
          %1102 = vmatprep.subr.mxu0 0.0
          %1103 = vmatpush2.msra.mxu0 0.0
          %1104 = vmatprep.subr.mxu0 0.0
          %1105 = vmatpush2.msra.mxu0 0.0
          %1106 = vmatprep.subr.mxu0 0.0
          %1107 = vmatpush2.msra.mxu0 0.0
          %1108 = vmatprep.subr.mxu0 0.0
          %1109 = vmatpush2.msra.mxu0 0.0
          %1110 = vmatprep.subr.mxu0 0.0
          %1111 = vmatpush2.msra.mxu0 0.0
          %1112 = vmatprep.subr.mxu0 0.0
          %1113 = vmatpush2.msra.mxu0 0.0
          %1114 = vmatprep.subr.mxu0 0.0
          %1115 = vmatpush2.msra.mxu0 0.0
          %1116 = vmatprep.subr.mxu0 0.0
          %1117 = vmatpush2.msra.mxu0 0.0
          %1118 = vmatprep.subr.mxu0 0.0
          %1119 = vmatpush2.msra.mxu0 0.0
          %1120 = vmatprep.mubr.f32.mxu0 0.0
          %1121 = vmatmul.mubr.f32.gmra.mxu0 %v1026
          %v1122 = vpop.f32.mrf.mxu0
          %v1123 = vadd.f32 %v1054, %v1122
          %v1124 = vpop.f32.mrf.mxu0
          %1125 = vdwg.mxu0
          %v1126 = vxor.u32 %v1123, 2147483648
          %v1127 = vmul.f32 %v1126, 1.442695
          %v1128 = vpow.pop %v1127
          %v1129 = vadd.f32 %v1128, 1.0
          %v1130 = vrcp.pop %v1129
          %v1131 = vmul.f32 1.0, %v1130
          %1132 = vst [vmem:[#allocation10] sm:$0xff] %v1131
        $region56: #{tpu_custom_call.1} parent=35 // pred_fallthru
          _
        // Predicated region
        $region57: #{tpu_custom_call.1} parent=35 // pred_check
          %p1133 = pneg %p141
        $region58: #{tpu_custom_call.1} parent=35 // pred_check_branch
          %1135 = sbr.rel (%p1133) target = $region60
        $region59: #{tpu_custom_call.1} parent=35 // pred_region
          %s1137 = ssub.s32 128, 128
          %1138 = vsyncadd [#allocation6], %s1137
          %s1139 = smul.addr %s24, 128
          %s1140 = scalar_lea.hbm %s4, %s1139
          %s1142 = sshll.u32 [#allocation10], 4
          %s1143 = int_to_ptr.vmem [resolvable:$true] %s1142
          %1145 = dma.vmem_to_hbm [thread:$0]  %s1143, 128, %s1140, [#allocation6]
        $region60: #{tpu_custom_call.1} parent=35 // pred_fallthru
          _
        // Predicated region
        $region61: #{tpu_custom_call.1} parent=35 // pred_check
          %p1146 = pneg %p141
        $region62: #{tpu_custom_call.1} parent=35 // pred_check_branch
          %1148 = sbr.rel (%p1146) target = $region64
        $region63: #{tpu_custom_call.1} parent=35 // pred_region
          %1149 = dma.done [#allocation6], 128
        $region64: #{tpu_custom_call.1} parent=35 // pred_fallthru
          _
      $region36: #{tpu_custom_call.1} parent=5 // pred_fallthru
        _
      %p1150 = scmp.le.s32.totalorder 2, %s15
      // Predicated region
      $region65: #{tpu_custom_call.1} parent=5 // pred_check
        %p1151 = pneg %p1150
      $region66: #{tpu_custom_call.1} parent=5 // pred_check_branch
        %1153 = sbr.rel (%p1151) target = $region68
      $region67: #{tpu_custom_call.1} parent=5 // pred_region
        %s1154 = ssub.s32 %s15, 2
      $region68: #{tpu_custom_call.1} parent=5 // pred_fallthru
        _
    $region6: #{tpu_custom_call.1} parent=1 // loop_footer
      %s19 = sadd.s32 1, %s15
    $region7: #{tpu_custom_call.1} parent=1 // loop_footer_branch
      %14 = sbr.rel target = $region3
    $region8: #{tpu_custom_call.1} parent=1 // loop_exit
      _
    %1155 = vsyncpa [#allocation5], 1
    %s1156 = scalar_lea.sflag [#allocation5], 1
    %1157 = vsyncpa %s1156, 1
    %1158 = vsyncpa [#allocation8], 1
    %1159 = vsyncpa [#allocation6], 1
    %s1160 = scalar_lea.sflag [#allocation6], 1
    %1161 = vsyncpa %s1160, 1

</llo_original>
